<compile_context>
chip_gen: v7x
topology: tpu7x:2x2x1
jax: 0.10.0
libtpu: 0.0.40
codegen_flags: <defaults>
</compile_context>

<pallas_src>
from functools import partial

import jax
import jax.numpy as jnp
from jax import lax
from jax.experimental import pallas as pl
from jax.experimental.pallas import tpu as pltpu


def _upconv_kernel(x_ref, w_ref, b_ref, o_ref):
    # x_ref: (1, Cin, H+2, W+2)  input (one batch element), zero-padded by 1
    # w_ref: (4*Cout, 9*Cin)     phase-combined weights, rows=(ph,pw,co), cols=(a,b,ci)
    # b_ref: (4*Cout, 1)         bias replicated per phase row
    # o_ref: (1, 4*Cout, H*W)    phase-separated output, spatial on lanes
    x = x_ref[0]                                   # (Cin, H+2, W+2)
    cin, hp2, wp2 = x.shape
    h, w = hp2 - 2, wp2 - 2
    hw = h * w

    # 3x3 im2col over the padded input: 9 shifted (Cin, H, W) windows -> (9*Cin, H*W)
    cols = [
        x[:, a:a + h, b:b + w].reshape(cin, hw)
        for a in range(3)
        for b in range(3)
    ]
    patch = jnp.concatenate(cols, axis=0)          # (9*Cin, H*W)

    # One MXU matmul for all 4 phases and all taps, f32 accumulation.
    out = jnp.dot(w_ref[...], patch, preferred_element_type=jnp.float32)
    out = out + b_ref[...]                         # (4*Cout, 1) broadcast
    o_ref[0] = out.astype(o_ref.dtype)


def upsample_conv_layer(x_nchw, weight, bias, *, stride, padding):
    """ConvTranspose2d forward. x_nchw: (N,Cin,H,W); weight: (Cin,Cout,K,K); bias: (Cout,)."""
    N, Cin, H, W = x_nchw.shape
    Cin_w, Cout, K, K2 = weight.shape
    assert Cin == Cin_w and K == K2
    # TODO(synk): phase decomposition below is specialized to the module's
    # kernel_size=4, stride=2, padding=1 configuration; other configs would need
    # a general sub-pixel decomposition.
    assert K == 4 and stride == 2 and padding == 1, (K, stride, padding)

    Hout, Wout = 2 * H, 2 * W
    HW = H * W

    # Zero-pad the ORIGINAL input by 1 on each spatial side (no dilation needed).
    xpad = jnp.pad(x_nchw, ((0, 0), (0, 0), (1, 1), (1, 1)))          # (N,Cin,H+2,W+2)

    # ConvTranspose == regular conv with flipped, in/out-swapped kernel:
    # wf[kh, kw, ci, co]
    wf = jnp.transpose(weight[:, :, ::-1, ::-1], (2, 3, 0, 1))        # (K,K,Cin,Cout)

    # Phase-combined weight: out[2m+ph, 2q+pw, co] =
    #   sum_{dh,dw,ci} xpad[ci, m+ph+dh, q+pw+dw] * wf[2dh+ph, 2dw+pw, ci, co]
    # Fold all 4 phases into one (4*Cout, 9*Cin) matrix over a 3x3 window.
    wbig6 = jnp.zeros((2, 2, Cout, 3, 3, Cin), weight.dtype)
    for ph in range(2):
        for pw in range(2):
            for dh in range(2):
                for dw in range(2):
                    wbig6 = wbig6.at[ph, pw, :, ph + dh, pw + dw, :].set(
                        wf[2 * dh + ph, 2 * dw + pw].T)               # (Cout, Cin)
    wbig = wbig6.reshape(4 * Cout, 9 * Cin)
    bbig = jnp.tile(bias, 4).reshape(4 * Cout, 1)

    out_ph = pl.pallas_call(
        _upconv_kernel,
        out_shape=jax.ShapeDtypeStruct((N, 4 * Cout, HW), x_nchw.dtype),
        grid_spec=pl.GridSpec(
            grid=(N,),
            in_specs=[
                pl.BlockSpec((1, Cin, H + 2, W + 2), lambda n: (n, 0, 0, 0)),
                pl.BlockSpec((4 * Cout, 9 * Cin), lambda n: (0, 0)),
                pl.BlockSpec((4 * Cout, 1), lambda n: (0, 0)),
            ],
            out_specs=pl.BlockSpec((1, 4 * Cout, HW), lambda n: (n, 0, 0)),
        ),
        compiler_params=pltpu.CompilerParams(
            dimension_semantics=("parallel",)),
    )(xpad, wbig, bbig)

    # Un-interleave the 4 phases: rows are ordered (ph, pw, co), lanes are m*W+q.
    # out[n, co, 2m+ph, 2q+pw] = out_ph[n, (ph,pw,co), m*W+q]
    out = out_ph.reshape(N, 2, 2, Cout, H, W)
    out = jnp.transpose(out, (0, 3, 4, 1, 5, 2))                      # (N,Cout,H,2,W,2)
    return out.reshape(N, Cout, Hout, Wout)


def _reference(x_nchw, weight, bias, *, stride, padding):
    """Pure-JAX reference for ConvTranspose2d (NCHW)."""
    K = weight.shape[2]
    w_oihw = jnp.transpose(weight[:, :, ::-1, ::-1], (1, 0, 2, 3))
    pad = K - 1 - padding
    out = lax.conv_general_dilated(
        x_nchw, w_oihw, window_strides=(1, 1),
        padding=[(pad, pad), (pad, pad)],
        lhs_dilation=(stride, stride),
        dimension_numbers=("NCHW", "OIHW", "NCHW"))
    return out + bias.reshape(1, -1, 1, 1)


if __name__ == "__main__":
    # Module config: UpsampleConvLayer(in_channels=4, out_channels=4, kernel_size=4, stride=2)
    in_channels, out_channels, kernel_size, stride, padding = 4, 4, 4, 2, 1

    key = jax.random.PRNGKey(0)
    kx, kw, kb = jax.random.split(key, 3)

    # x in PyTorch NCHW convention
    x = jax.random.normal(kx, (2, in_channels, 16, 16), jnp.float32)
    # ConvTranspose2d weight shape: (in_channels, out_channels, kH, kW)
    weight = 0.1 * jax.random.normal(
        kw, (in_channels, out_channels, kernel_size, kernel_size), jnp.float32)
    bias = 0.1 * jax.random.normal(kb, (out_channels,), jnp.float32)

    fwd = jax.jit(partial(upsample_conv_layer, stride=stride, padding=padding))
    out = fwd(x, weight, bias)
    out = jax.block_until_ready(out)

    ref = _reference(x, weight, bias, stride=stride, padding=padding)
    assert out.shape == (2, out_channels, 32, 32), out.shape
    assert jnp.allclose(out, ref, atol=1e-4, rtol=1e-4), float(jnp.max(jnp.abs(out - ref)))

    print("KERNEL_OK")
</pallas_src>

<mosaic_0001>
module attributes {stable_mosaic.version = 11 : i64} {
  func.func @_upconv_kernel(%arg0: i32, %arg1: memref<1x4x18x18xf32, #tpu.memory_space<vmem>>, %arg2: memref<16x36xf32, #tpu.memory_space<vmem>>, %arg3: memref<16x1xf32, #tpu.memory_space<vmem>>, %arg4: memref<1x16x256xf32, #tpu.memory_space<vmem>>) attributes {dimension_semantics = [#tpu.dimension_semantics<parallel>], iteration_bounds = array<i64: 2>, scalar_prefetch = 0 : i64, scratch_operands = 0 : i64, tpu.core_type = #tpu.core_type<tc>, window_params = [{transform_indices = @transform_0, window_bounds = array<i64: 1, 4, 18, 18>}, {pipeline_mode = #tpu.pipeline_mode<synchronous>, transform_indices = @transform_1, window_bounds = array<i64: 16, 36>}, {pipeline_mode = #tpu.pipeline_mode<synchronous>, transform_indices = @transform_2, window_bounds = array<i64: 16, 1>}, {transform_indices = @transform_3, window_bounds = array<i64: 1, 16, 256>}]} {
    %c0 = arith.constant 0 : index
    %c0_0 = arith.constant 0 : index
    %c0_1 = arith.constant 0 : index
    %c0_2 = arith.constant 0 : index
    %0 = vector.load %arg1[%c0, %c0_0, %c0_1, %c0_2] : memref<1x4x18x18xf32, #tpu.memory_space<vmem>>, vector<1x4x18x18xf32>
    %1 = vector.shape_cast %0 : vector<1x4x18x18xf32> to vector<4x18x18xf32>
    %2 = vector.extract_strided_slice %1 {offsets = [0, 0, 0], sizes = [4, 16, 16], strides = [1, 1, 1]} : vector<4x18x18xf32> to vector<4x16x16xf32>
    %3 = vector.shape_cast %2 : vector<4x16x16xf32> to vector<4x256xf32>
    %4 = vector.extract_strided_slice %1 {offsets = [0, 0, 1], sizes = [4, 16, 16], strides = [1, 1, 1]} : vector<4x18x18xf32> to vector<4x16x16xf32>
    %5 = vector.shape_cast %4 : vector<4x16x16xf32> to vector<4x256xf32>
    %6 = vector.extract_strided_slice %1 {offsets = [0, 0, 2], sizes = [4, 16, 16], strides = [1, 1, 1]} : vector<4x18x18xf32> to vector<4x16x16xf32>
    %7 = vector.shape_cast %6 : vector<4x16x16xf32> to vector<4x256xf32>
    %8 = vector.extract_strided_slice %1 {offsets = [0, 1, 0], sizes = [4, 16, 16], strides = [1, 1, 1]} : vector<4x18x18xf32> to vector<4x16x16xf32>
    %9 = vector.shape_cast %8 : vector<4x16x16xf32> to vector<4x256xf32>
    %10 = vector.extract_strided_slice %1 {offsets = [0, 1, 1], sizes = [4, 16, 16], strides = [1, 1, 1]} : vector<4x18x18xf32> to vector<4x16x16xf32>
    %11 = vector.shape_cast %10 : vector<4x16x16xf32> to vector<4x256xf32>
    %12 = vector.extract_strided_slice %1 {offsets = [0, 1, 2], sizes = [4, 16, 16], strides = [1, 1, 1]} : vector<4x18x18xf32> to vector<4x16x16xf32>
    %13 = vector.shape_cast %12 : vector<4x16x16xf32> to vector<4x256xf32>
    %14 = vector.extract_strided_slice %1 {offsets = [0, 2, 0], sizes = [4, 16, 16], strides = [1, 1, 1]} : vector<4x18x18xf32> to vector<4x16x16xf32>
    %15 = vector.shape_cast %14 : vector<4x16x16xf32> to vector<4x256xf32>
    %16 = vector.extract_strided_slice %1 {offsets = [0, 2, 1], sizes = [4, 16, 16], strides = [1, 1, 1]} : vector<4x18x18xf32> to vector<4x16x16xf32>
    %17 = vector.shape_cast %16 : vector<4x16x16xf32> to vector<4x256xf32>
    %18 = vector.extract_strided_slice %1 {offsets = [0, 2, 2], sizes = [4, 16, 16], strides = [1, 1, 1]} : vector<4x18x18xf32> to vector<4x16x16xf32>
    %19 = vector.shape_cast %18 : vector<4x16x16xf32> to vector<4x256xf32>
    %20 = tpu.concatenate %3, %5, %7, %9, %11, %13, %15, %17, %19 in 0 : vector<4x256xf32>, vector<4x256xf32>, vector<4x256xf32>, vector<4x256xf32>, vector<4x256xf32>, vector<4x256xf32>, vector<4x256xf32>, vector<4x256xf32>, vector<4x256xf32> -> vector<36x256xf32>
    %c0_3 = arith.constant 0 : index
    %c0_4 = arith.constant 0 : index
    %21 = vector.load %arg2[%c0_3, %c0_4] : memref<16x36xf32, #tpu.memory_space<vmem>>, vector<16x36xf32>
    %cst = arith.constant dense<0.000000e+00> : vector<16x256xf32>
    %22 = tpu.matmul %21, %20, %cst {dimension_numbers = #tpu.dot_dimension_numbers<[1], [0], [0], [1], [0, 0, 1, 1], [], []>} : vector<16x36xf32>, vector<36x256xf32>, vector<16x256xf32> -> vector<16x256xf32>
    %c0_5 = arith.constant 0 : index
    %c0_6 = arith.constant 0 : index
    %23 = vector.load %arg3[%c0_5, %c0_6] : memref<16x1xf32, #tpu.memory_space<vmem>>, vector<16x1xf32>
    %24 = vector.broadcast %23 : vector<16x1xf32> to vector<16x256xf32>
    %25 = arith.addf %22, %24 : vector<16x256xf32>
    %c0_7 = arith.constant 0 : index
    %c0_8 = arith.constant 0 : index
    %c0_9 = arith.constant 0 : index
    %26 = vector.load %arg4[%c0_7, %c0_8, %c0_9] : memref<1x16x256xf32, #tpu.memory_space<vmem>>, vector<1x16x256xf32>
    %27 = vector.shape_cast %26 : vector<1x16x256xf32> to vector<16x256xf32>
    %28 = vector.shape_cast %25 : vector<16x256xf32> to vector<1x16x256xf32>
    tpu.vector_store %arg4[%c0_7, %c0_8, %c0_9], %28 {strides = array<i32>} : memref<1x16x256xf32, #tpu.memory_space<vmem>>, vector<1x16x256xf32>,
    return
  }
  func.func @transform_0(%arg0: i32) -> (i32, i32, i32, i32) {
    %c0_i32 = arith.constant 0 : i32
    %c0_i32_0 = arith.constant 0 : i32
    %c0_i32_1 = arith.constant 0 : i32
    %c0_i32_2 = arith.constant 0 : i32
    return %arg0, %c0_i32, %c0_i32_0, %c0_i32_1 : i32, i32, i32, i32
  }
  func.func @transform_1(%arg0: i32) -> (i32, i32) {
    %c0_i32 = arith.constant 0 : i32
    %c0_i32_0 = arith.constant 0 : i32
    %c0_i32_1 = arith.constant 0 : i32
    return %c0_i32, %c0_i32_0 : i32, i32
  }
  func.func @transform_2(%arg0: i32) -> (i32, i32) {
    %c0_i32 = arith.constant 0 : i32
    %c0_i32_0 = arith.constant 0 : i32
    %c0_i32_1 = arith.constant 0 : i32
    return %c0_i32, %c0_i32_0 : i32, i32
  }
  func.func @transform_3(%arg0: i32) -> (i32, i32, i32) {
    %c0_i32 = arith.constant 0 : i32
    %c0_i32_0 = arith.constant 0 : i32
    %c0_i32_1 = arith.constant 0 : i32
    return %arg0, %c0_i32, %c0_i32_0 : i32, i32, i32
  }
}

</mosaic_0001>

<llo_original>
// kernel: tile.8
$region0: #{tile.8}
  #allocation0 [shape = 's32[1]{0}', space=sflag, size = 0x4, scoped, tag = 'scoped memory for tile.8']
  %s0 = inlined_call_operand.vmem [shape: f32[4], index: 0, kind: input, shape index: {}]
  %s1 = inlined_call_operand.vmem [shape: f32[4,4], index: 1, kind: output, shape index: {}]
  // Predicated region
  $region2: #{tile.8} parent=0 // pred_check
    _
  $region3: #{tile.8} parent=0 // pred_check_branch
    %3 = sbr.rel (0) target = $region5
  $region4: #{tile.8} parent=0 // pred_region
    _
  $region5: #{tile.8} parent=0 // pred_fallthru
    _
  %v4 = vld [vmem:[%s0] ss:$0 sm:$0xff]
  %5 = vst [vmem:[%s1] sm:$0xf] %v4

// kernel: tile.0
$region0: #{tile.0}
  %s0 = inlined_call_operand.vmem [shape: f32[4,4], index: 0, kind: input, shape index: {}]
  %s1 = inlined_call_operand.vmem [shape: f32[16,1], index: 1, kind: output, shape index: {}]
  $region1: #{tile.0} parent=0
    #allocation0 [shape = 'u8[4096]{0}', space=vmem, size = 0x1000, scoped, tag = 'scoped mem for input reshape']
    %s3 = sshllo.u32 0, 4
    %v4 = vld [vmem:[%s0] sm:%s3]
    %5 = vst [vmem:[#allocation0] sm:%s3] %v4
    %v6 = vld [vmem:[#allocation0] sm:$0xf]
    %vm7 = vcmask 7168
    %8 = vst.msk [vmem:[%s1] ss:$4 sm:$0xf] %vm7, %v6
    %v9 = vld [vmem:[#allocation0] sm:$0xf]
    %10 = vrot.lane.b32.xlu0 %v9, 127
    %v11 = vpop.permute.xlu0 %10
    %vm12 = vcmask 7168
    %s13 = scalar_lea.vmem %s1, 1
    %14 = vst.msk [vmem:[%s13] ss:$4 sm:$0xf] %vm12, %v11
    %v15 = vld [vmem:[#allocation0] sm:$0xf]
    %16 = vrot.lane.b32.xlu0 %v15, 126
    %v17 = vpop.permute.xlu0 %16
    %vm18 = vcmask 7168
    %s19 = scalar_lea.vmem %s1, 2
    %20 = vst.msk [vmem:[%s19] ss:$4 sm:$0xf] %vm18, %v17
    %v21 = vld [vmem:[#allocation0] sm:$0xf]
    %22 = vrot.lane.b32.xlu0 %v21, 125
    %v23 = vpop.permute.xlu0 %22
    %vm24 = vcmask 7168
    %s25 = scalar_lea.vmem %s1, 3
    %26 = vst.msk [vmem:[%s25] ss:$4 sm:$0xf] %vm24, %v23

// kernel: upsample_conv_layer.1
$region0: #{upsample_conv_layer.1}
  #allocation0 [shape = 'u32[]', space=smem, size = 0x4, offset = 0x4, fixed_abs, tag = 'smem constant byte address 0x4 - core index']
  #allocation1 [shape = 'u32[144,128]{1,0:T(1,128)}', space=vmem, size = 0x12000, scoped, tag = 'internal scratch']
  %s0 = inlined_call_operand.vmem [shape: f32[2,4,18,18], index: 0, kind: input, shape index: {}]
  %s1 = inlined_call_operand.vmem [shape: f32[16,36], index: 1, kind: input, shape index: {}]
  %s2 = inlined_call_operand.vmem [shape: f32[16,1], index: 2, kind: input, shape index: {}]
  %s3 = inlined_call_operand.vmem [shape: f32[2,16,256], index: 3, kind: output, shape index: {}]
  %s4 = sld [smem:[#allocation0]]
  $region45: #{upsample_conv_layer.1} parent=0
    _
  %s6 = ssub.s32 1, %s4
  %s7 = scalar_select 0, %s6, %s4
  loop: start=0, step=1, limit=4
  $region2: #{upsample_conv_layer.1} parent=0 // loop_pre_header
    _
  $region3: #{upsample_conv_layer.1} parent=0 // loop_header
    %s9 = sphi 0, %s13
    %p10 = scmp.ge.s32.totalorder %s9, 4
    %s19 = sphi 0, %s21
    %s22 = sphi 0, %s19
    %s23 = sphi 0, %s22
    %s39 = sphi 0, %s23
    %s43 = sphi 0, %s43
    %s45 = sphi 0, %s43
    %s46 = sphi 0, %s45
    %s60 = sphi 0, %s46
    %s64 = sphi 0, %s64
    %s66 = sphi 0, %s64
    %s67 = sphi 0, %s66
    %s81 = sphi 0, %s67
    %s87 = sphi 0, %s89
    %s90 = sphi 0, %s87
    %s91 = sphi 0, %s90
    %s107 = sphi 0, %s91
  $region4: #{upsample_conv_layer.1} parent=0 // loop_header_branch
    %12 = sbr.rel (%p10) target = $region8
  $region5: #{upsample_conv_layer.1} parent=0 // loop_body
    %s14 = ssub.s32 %s9, 1
    %s15 = ssub.s32 %s9, 2
    %s16 = sadd.s32 %s9, 1
    %s17 = ssub.s32 %s9, %s16
    %p18 = scmp.eq.s32.totalorder %s17, 0
    %s20 = sadd.s32 %s19, 1
    %s21 = scalar_select %p18, %s19, %s20
    %p24 = pneg %p18
    %p25 = scmp.eq.s32.totalorder %s9, 1
    %p26 = por %p24, %p25
    %p27 = scmp.ne.s32.totalorder %s19, %s22
    %p28 = scmp.eq.s32.totalorder %s9, 0
    %p29 = por %p27, %p28
    %p30 = scmp.ne.s32.totalorder %s19, %s22
    %p31 = scmp.eq.s32.totalorder %s14, 1
    %p32 = por %p30, %p31
    %p33 = scmp.ne.s32.totalorder %s22, %s23
    %p34 = scmp.eq.s32.totalorder %s14, 0
    %p35 = por %p33, %p34
    %p36 = scmp.ne.s32.totalorder %s22, %s23
    %p37 = scmp.eq.s32.totalorder %s15, 1
    %p38 = por %p36, %p37
    %p40 = scmp.ne.s32.totalorder %s23, %s39
    %p41 = scmp.eq.s32.totalorder %s15, 0
    %p42 = por %p40, %p41
    %s44 = sadd.s32 %s43, 1
    %p47 = scmp.eq.s32.totalorder %s9, 1
    %p48 = scmp.ne.s32.totalorder %s43, %s45
    %p49 = scmp.eq.s32.totalorder %s9, 0
    %p50 = por %p48, %p49
    %p51 = scmp.ne.s32.totalorder %s43, %s45
    %p52 = scmp.eq.s32.totalorder %s14, 1
    %p53 = por %p51, %p52
    %p54 = scmp.ne.s32.totalorder %s45, %s46
    %p55 = scmp.eq.s32.totalorder %s14, 0
    %p56 = por %p54, %p55
    %p57 = scmp.ne.s32.totalorder %s45, %s46
    %p58 = scmp.eq.s32.totalorder %s15, 1
    %p59 = por %p57, %p58
    %p61 = scmp.ne.s32.totalorder %s46, %s60
    %p62 = scmp.eq.s32.totalorder %s15, 0
    %p63 = por %p61, %p62
    %s65 = sadd.s32 %s64, 1
    %p68 = scmp.eq.s32.totalorder %s9, 1
    %p69 = scmp.ne.s32.totalorder %s64, %s66
    %p70 = scmp.eq.s32.totalorder %s9, 0
    %p71 = por %p69, %p70
    %p72 = scmp.ne.s32.totalorder %s64, %s66
    %p73 = scmp.eq.s32.totalorder %s14, 1
    %p74 = por %p72, %p73
    %p75 = scmp.ne.s32.totalorder %s66, %s67
    %p76 = scmp.eq.s32.totalorder %s14, 0
    %p77 = por %p75, %p76
    %p78 = scmp.ne.s32.totalorder %s66, %s67
    %p79 = scmp.eq.s32.totalorder %s15, 1
    %p80 = por %p78, %p79
    %p82 = scmp.ne.s32.totalorder %s67, %s81
    %p83 = scmp.eq.s32.totalorder %s15, 0
    %p84 = por %p82, %p83
    %s85 = ssub.s32 %s9, %s16
    %p86 = scmp.eq.s32.totalorder %s85, 0
    %s88 = sadd.s32 %s87, 1
    %s89 = scalar_select %p86, %s87, %s88
    %p92 = pneg %p86
    %p93 = scmp.eq.s32.totalorder %s9, 1
    %p94 = por %p92, %p93
    %p95 = scmp.ne.s32.totalorder %s87, %s90
    %p96 = scmp.eq.s32.totalorder %s9, 0
    %p97 = por %p95, %p96
    %p98 = scmp.ne.s32.totalorder %s87, %s90
    %p99 = scmp.eq.s32.totalorder %s14, 1
    %p100 = por %p98, %p99
    %p101 = scmp.ne.s32.totalorder %s90, %s91
    %p102 = scmp.eq.s32.totalorder %s14, 0
    %p103 = por %p101, %p102
    %p104 = scmp.ne.s32.totalorder %s90, %s91
    %p105 = scmp.eq.s32.totalorder %s15, 1
    %p106 = por %p104, %p105
    %p108 = scmp.ne.s32.totalorder %s91, %s107
    %p109 = scmp.eq.s32.totalorder %s15, 0
    %p110 = por %p108, %p109
    %p111 = scmp.le.s32.totalorder 1, %s9
    %p112 = scmp.lt.s32.totalorder %s9, 3
    %p113 = pnand %p111, %p112
    %p114 = pneg %p113
    // Predicated region
    $region9: #{upsample_conv_layer.1} parent=5 // pred_check
      _
    $region10: #{upsample_conv_layer.1} parent=5 // pred_check_branch
      %116 = sbr.rel (%p113) target = $region12
    $region11: #{upsample_conv_layer.1} parent=5 // pred_region
      %s117 = ssub.s32 %s9, 1
      // Predicated region
      $region13: #{upsample_conv_layer.1} parent=11 // pred_check
        %p118 = pneg %p56
      $region14: #{upsample_conv_layer.1} parent=11 // pred_check_branch
        %120 = sbr.rel (%p118) target = $region16
      $region15: #{upsample_conv_layer.1} parent=11 // pred_region
        _
      $region16: #{upsample_conv_layer.1} parent=11 // pred_fallthru
        _
      // Predicated region
      $region17: #{upsample_conv_layer.1} parent=11 // pred_check
        %p121 = pneg %p77
      $region18: #{upsample_conv_layer.1} parent=11 // pred_check_branch
        %123 = sbr.rel (%p121) target = $region20
      $region19: #{upsample_conv_layer.1} parent=11 // pred_region
        _
      $region20: #{upsample_conv_layer.1} parent=11 // pred_fallthru
        _
    $region12: #{upsample_conv_layer.1} parent=5 // pred_fallthru
      _
    %p124 = scmp.lt.s32.totalorder %s9, 2
    // Predicated region
    $region21: #{upsample_conv_layer.1} parent=5 // pred_check
      %p125 = pneg %p124
    $region22: #{upsample_conv_layer.1} parent=5 // pred_check_branch
      %127 = sbr.rel (%p125) target = $region24
    $region23: #{upsample_conv_layer.1} parent=5 // pred_region
      // Predicated region
      $region25: #{upsample_conv_layer.1} parent=23 // pred_check
        %p128 = pneg %p29
      $region26: #{upsample_conv_layer.1} parent=23 // pred_check_branch
        %130 = sbr.rel (%p128) target = $region28
      $region27: #{upsample_conv_layer.1} parent=23 // pred_region
        %p131 = scmp.lt.s32.totalorder %s9, 1
        %s132 = scalar_select %p131, %s9, 1
        %s133 = smul.addr %s132, 12
        %s134 = smul.addr %s133, 8
        %s135 = scalar_lea.vmem %s0, %s134
      $region28: #{upsample_conv_layer.1} parent=23 // pred_fallthru
        _
    $region24: #{upsample_conv_layer.1} parent=5 // pred_fallthru
      _
    %p136 = scmp.le.s32.totalorder 1, %s9
    %p137 = scmp.lt.s32.totalorder %s9, 3
    %p138 = pnand %p136, %p137
    %p139 = pneg %p138
    // Predicated region
    $region29: #{upsample_conv_layer.1} parent=5 // pred_check
      _
    $region30: #{upsample_conv_layer.1} parent=5 // pred_check_branch
      %141 = sbr.rel (%p138) target = $region32
    $region31: #{upsample_conv_layer.1} parent=5 // pred_region
      %s142 = ssub.s32 %s9, 1
      %p143 = scmp.lt.s32.totalorder %s14, 1
      %s144 = scalar_select %p143, %s14, 1
      %s145 = smul.addr %s144, 12
      %s146 = smul.addr %s145, 8
      %s147 = scalar_lea.vmem %s0, %s146
      %p148 = pneg %p35
      %p149 = pneg %p32
      %p150 = pneg %p56
      %p151 = pneg %p53
      %p152 = pneg %p77
      %p153 = pneg %p74
      %p154 = pneg %p103
      %p155 = pneg %p100
      %p156 = scmp.lt.s32.totalorder %s14, 1
      %s157 = scalar_select %p156, %s14, 1
      %s158 = smul.addr %s157, 4
      %s159 = smul.addr %s158, 8
      %s160 = scalar_lea.vmem %s3, %s159
      %p161 = scmp.lt.s32.totalorder %s14, 1
      %s162 = scalar_select %p161, %s14, 1
      %s163 = smul.addr %s162, 12
      %s164 = smul.addr %s163, 8
      %s165 = scalar_lea.vmem %s0, %s164
      %p166 = scmp.lt.s32.totalorder %s14, 1
      %s167 = scalar_select %p166, %s14, 1
      %s168 = smul.addr %s167, 4
      %s169 = smul.addr %s168, 8
      %s170 = scalar_lea.vmem %s3, %s169
      %v171 = vld [vmem:[%s165] sm:$0xff]
      %v172 = vld [vmem:[%s165 + $0x8] sm:$0xff]
      %v173 = vld [vmem:[%s165 + $0x10] sm:$0x3]
      %v174 = vld [vmem:[%s165 + $0x18] sm:$0xff]
      %v175 = vld [vmem:[%s165 + $0x20] sm:$0xff]
      %v176 = vld [vmem:[%s165 + $0x28] sm:$0x3]
      %v177 = vld [vmem:[%s165 + $0x30] sm:$0xff]
      %v178 = vld [vmem:[%s165 + $0x38] sm:$0xff]
      %v179 = vld [vmem:[%s165 + $0x40] sm:$0x3]
      %v180 = vld [vmem:[%s165 + $0x48] sm:$0xff]
      %v181 = vld [vmem:[%s165 + $0x50] sm:$0xff]
      %v182 = vld [vmem:[%s165 + $0x58] sm:$0x3]
      %v183 = vcombine.low %v171, %v177
      %v184 = vcombine.high %v171, %v177
      %v186 = vunpack.c.l.s4 1983009808
      %v187 = vunpack.c.0.s8 %v186
      %v188 = vlaneseq
      %v189 = vshrl.u32 %v188, 7
      %v190 = vsub.s32 %v187, %v189
      %v191 = vrot.slane %v183, %v190
      %v193 = vunpack.c.l.s4 1983009808
      %v194 = vunpack.c.0.s8 %v193
      %v195 = vlaneseq
      %v196 = vshrl.u32 %v195, 7
      %v197 = vsub.s32 %v194, %v196
      %v198 = vrot.slane %v184, %v197
      %v199 = vcombine.low %v174, %v180
      %v200 = vcombine.high %v174, %v180
      %v202 = vunpack.c.l.s4 1983009808
      %v203 = vunpack.c.0.s8 %v202
      %v204 = vlaneseq
      %v205 = vshrl.u32 %v204, 7
      %v206 = vsub.s32 %v203, %v205
      %v207 = vrot.slane %v199, %v206
      %v209 = vunpack.c.l.s4 1983009808
      %v210 = vunpack.c.0.s8 %v209
      %v211 = vlaneseq
      %v212 = vshrl.u32 %v211, 7
      %v213 = vsub.s32 %v210, %v212
      %v214 = vrot.slane %v200, %v213
      %v215 = vcombine.low %v191, %v207
      %v216 = vcombine.high %v191, %v207
      %v218 = vunpack.c.l.s4 1934713408
      %v219 = vunpack.c.0.s8 %v218
      %v220 = vlaneseq
      %v221 = vshrl.u32 %v220, 7
      %v222 = vsub.s32 %v219, %v221
      %v223 = vrot.slane %v215, %v222
      %v225 = vunpack.c.l.s4 1934713408
      %v226 = vunpack.c.0.s8 %v225
      %v227 = vlaneseq
      %v228 = vshrl.u32 %v227, 7
      %v229 = vsub.s32 %v226, %v228
      %v230 = vrot.slane %v216, %v229
      %v231 = vcombine.low %v198, %v214
      %v232 = vcombine.high %v198, %v214
      %v234 = vunpack.c.l.s4 1934713408
      %v235 = vunpack.c.0.s8 %v234
      %v236 = vlaneseq
      %v237 = vshrl.u32 %v236, 7
      %v238 = vsub.s32 %v235, %v237
      %v239 = vrot.slane %v231, %v238
      %v241 = vunpack.c.l.s4 1934713408
      %v242 = vunpack.c.0.s8 %v241
      %v243 = vlaneseq
      %v244 = vshrl.u32 %v243, 7
      %v245 = vsub.s32 %v242, %v244
      %v246 = vrot.slane %v232, %v245
      %v247 = vcombine.high %v223, 0.0
      %v248 = vcombine.high %v230, 0.0
      %v249 = vcombine.high %v239, 0.0
      %v250 = vcombine.high %v246, 0.0
      %v251 = vcombine.low %v172, %v178
      %v252 = vcombine.high %v172, %v178
      %v254 = vunpack.c.l.s4 1983009808
      %v255 = vunpack.c.0.s8 %v254
      %v256 = vlaneseq
      %v257 = vshrl.u32 %v256, 7
      %v258 = vsub.s32 %v255, %v257
      %v259 = vrot.slane %v251, %v258
      %v261 = vunpack.c.l.s4 1983009808
      %v262 = vunpack.c.0.s8 %v261
      %v263 = vlaneseq
      %v264 = vshrl.u32 %v263, 7
      %v265 = vsub.s32 %v262, %v264
      %v266 = vrot.slane %v252, %v265
      %v267 = vcombine.low %v175, %v181
      %v268 = vcombine.high %v175, %v181
      %v270 = vunpack.c.l.s4 1983009808
      %v271 = vunpack.c.0.s8 %v270
      %v272 = vlaneseq
      %v273 = vshrl.u32 %v272, 7
      %v274 = vsub.s32 %v271, %v273
      %v275 = vrot.slane %v267, %v274
      %v277 = vunpack.c.l.s4 1983009808
      %v278 = vunpack.c.0.s8 %v277
      %v279 = vlaneseq
      %v280 = vshrl.u32 %v279, 7
      %v281 = vsub.s32 %v278, %v280
      %v282 = vrot.slane %v268, %v281
      %v283 = vcombine.low %v259, %v275
      %v284 = vcombine.high %v259, %v275
      %v286 = vunpack.c.l.s4 1934713408
      %v287 = vunpack.c.0.s8 %v286
      %v288 = vlaneseq
      %v289 = vshrl.u32 %v288, 7
      %v290 = vsub.s32 %v287, %v289
      %v291 = vrot.slane %v283, %v290
      %v293 = vunpack.c.l.s4 1934713408
      %v294 = vunpack.c.0.s8 %v293
      %v295 = vlaneseq
      %v296 = vshrl.u32 %v295, 7
      %v297 = vsub.s32 %v294, %v296
      %v298 = vrot.slane %v284, %v297
      %v299 = vcombine.low %v266, %v282
      %v300 = vcombine.high %v266, %v282
      %v302 = vunpack.c.l.s4 1934713408
      %v303 = vunpack.c.0.s8 %v302
      %v304 = vlaneseq
      %v305 = vshrl.u32 %v304, 7
      %v306 = vsub.s32 %v303, %v305
      %v307 = vrot.slane %v299, %v306
      %v309 = vunpack.c.l.s4 1934713408
      %v310 = vunpack.c.0.s8 %v309
      %v311 = vlaneseq
      %v312 = vshrl.u32 %v311, 7
      %v313 = vsub.s32 %v310, %v312
      %v314 = vrot.slane %v300, %v313
      %v315 = vcombine.high %v291, 0.0
      %v316 = vcombine.high %v298, 0.0
      %v317 = vcombine.high %v307, 0.0
      %v318 = vcombine.high %v314, 0.0
      %320 = vrot.lane.b32.xlu0 %v247, 16
      %v321 = vpop.permute.xlu0 %320
      %324 = vrot.lane.b32.xlu0 %v230, 32
      %v325 = vpop.permute.xlu0 %324
      %328 = vrot.lane.b32.xlu0 %v248, 48
      %v329 = vpop.permute.xlu0 %328
      %332 = vrot.lane.b32.xlu0 %v239, 64
      %v333 = vpop.permute.xlu0 %332
      %336 = vrot.lane.b32.xlu0 %v249, 80
      %v337 = vpop.permute.xlu0 %336
      %340 = vrot.lane.b32.xlu0 %v246, 96
      %v341 = vpop.permute.xlu0 %340
      %344 = vrot.lane.b32.xlu0 %v250, 112
      %v345 = vpop.permute.xlu0 %344
      %348 = vrot.lane.b32.xlu0 %v315, 16
      %v349 = vpop.permute.xlu0 %348
      %352 = vrot.lane.b32.xlu0 %v298, 32
      %v353 = vpop.permute.xlu0 %352
      %356 = vrot.lane.b32.xlu0 %v316, 48
      %v357 = vpop.permute.xlu0 %356
      %360 = vrot.lane.b32.xlu0 %v307, 64
      %v361 = vpop.permute.xlu0 %360
      %364 = vrot.lane.b32.xlu0 %v317, 80
      %v365 = vpop.permute.xlu0 %364
      %368 = vrot.lane.b32.xlu0 %v314, 96
      %v369 = vpop.permute.xlu0 %368
      %372 = vrot.lane.b32.xlu0 %v318, 112
      %v373 = vpop.permute.xlu0 %372
      %vm375 = vcmask 130048
      %v376 = vsel %vm375, %v223, %v321
      %vm377 = vcmask 261120
      %v378 = vsel %vm377, %v376, %v325
      %vm379 = vcmask 392192
      %v380 = vsel %vm379, %v378, %v329
      %vm381 = vcmask 523264
      %v382 = vsel %vm381, %v380, %v333
      %vm383 = vcmask 654336
      %v384 = vsel %vm383, %v382, %v337
      %vm385 = vcmask 785408
      %v386 = vsel %vm385, %v384, %v341
      %vm387 = vcmask 916480
      %v388 = vsel %vm387, %v386, %v345
      %v389 = vsel %vm375, %v291, %v349
      %v390 = vsel %vm377, %v389, %v353
      %v391 = vsel %vm379, %v390, %v357
      %v392 = vsel %vm381, %v391, %v361
      %v393 = vsel %vm383, %v392, %v365
      %v394 = vsel %vm385, %v393, %v369
      %v395 = vsel %vm387, %v394, %v373
      %404 = vrot.lane.b32.xlu0 %v171, 127
      %v405 = vpop.permute.xlu0 %404
      %406 = vrot.lane.b32.xlu0 %v172, 127
      %v407 = vpop.permute.xlu0 %406
      %408 = vrot.lane.b32.xlu0 %v174, 127
      %v409 = vpop.permute.xlu0 %408
      %410 = vrot.lane.b32.xlu0 %v175, 127
      %v411 = vpop.permute.xlu0 %410
      %412 = vrot.lane.b32.xlu0 %v177, 127
      %v413 = vpop.permute.xlu0 %412
      %414 = vrot.lane.b32.xlu0 %v178, 127
      %v415 = vpop.permute.xlu0 %414
      %416 = vrot.lane.b32.xlu0 %v180, 127
      %v417 = vpop.permute.xlu0 %416
      %418 = vrot.lane.b32.xlu0 %v181, 127
      %v419 = vpop.permute.xlu0 %418
      %v428 = vcombine.low %v405, %v413
      %v429 = vcombine.high %v405, %v413
      %v431 = vunpack.c.l.s4 1983009808
      %v432 = vunpack.c.0.s8 %v431
      %v433 = vlaneseq
      %v434 = vshrl.u32 %v433, 7
      %v435 = vsub.s32 %v432, %v434
      %v436 = vrot.slane %v428, %v435
      %v438 = vunpack.c.l.s4 1983009808
      %v439 = vunpack.c.0.s8 %v438
      %v440 = vlaneseq
      %v441 = vshrl.u32 %v440, 7
      %v442 = vsub.s32 %v439, %v441
      %v443 = vrot.slane %v429, %v442
      %v444 = vcombine.low %v409, %v417
      %v445 = vcombine.high %v409, %v417
      %v447 = vunpack.c.l.s4 1983009808
      %v448 = vunpack.c.0.s8 %v447
      %v449 = vlaneseq
      %v450 = vshrl.u32 %v449, 7
      %v451 = vsub.s32 %v448, %v450
      %v452 = vrot.slane %v444, %v451
      %v454 = vunpack.c.l.s4 1983009808
      %v455 = vunpack.c.0.s8 %v454
      %v456 = vlaneseq
      %v457 = vshrl.u32 %v456, 7
      %v458 = vsub.s32 %v455, %v457
      %v459 = vrot.slane %v445, %v458
      %v460 = vcombine.low %v436, %v452
      %v461 = vcombine.high %v436, %v452
      %v463 = vunpack.c.l.s4 1934713408
      %v464 = vunpack.c.0.s8 %v463
      %v465 = vlaneseq
      %v466 = vshrl.u32 %v465, 7
      %v467 = vsub.s32 %v464, %v466
      %v468 = vrot.slane %v460, %v467
      %v470 = vunpack.c.l.s4 1934713408
      %v471 = vunpack.c.0.s8 %v470
      %v472 = vlaneseq
      %v473 = vshrl.u32 %v472, 7
      %v474 = vsub.s32 %v471, %v473
      %v475 = vrot.slane %v461, %v474
      %v476 = vcombine.low %v443, %v459
      %v477 = vcombine.high %v443, %v459
      %v479 = vunpack.c.l.s4 1934713408
      %v480 = vunpack.c.0.s8 %v479
      %v481 = vlaneseq
      %v482 = vshrl.u32 %v481, 7
      %v483 = vsub.s32 %v480, %v482
      %v484 = vrot.slane %v476, %v483
      %v486 = vunpack.c.l.s4 1934713408
      %v487 = vunpack.c.0.s8 %v486
      %v488 = vlaneseq
      %v489 = vshrl.u32 %v488, 7
      %v490 = vsub.s32 %v487, %v489
      %v491 = vrot.slane %v477, %v490
      %v492 = vcombine.high %v468, 0.0
      %v493 = vcombine.high %v475, 0.0
      %v494 = vcombine.high %v484, 0.0
      %v495 = vcombine.high %v491, 0.0
      %v496 = vcombine.low %v407, %v415
      %v497 = vcombine.high %v407, %v415
      %v499 = vunpack.c.l.s4 1983009808
      %v500 = vunpack.c.0.s8 %v499
      %v501 = vlaneseq
      %v502 = vshrl.u32 %v501, 7
      %v503 = vsub.s32 %v500, %v502
      %v504 = vrot.slane %v496, %v503
      %v506 = vunpack.c.l.s4 1983009808
      %v507 = vunpack.c.0.s8 %v506
      %v508 = vlaneseq
      %v509 = vshrl.u32 %v508, 7
      %v510 = vsub.s32 %v507, %v509
      %v511 = vrot.slane %v497, %v510
      %v512 = vcombine.low %v411, %v419
      %v513 = vcombine.high %v411, %v419
      %v515 = vunpack.c.l.s4 1983009808
      %v516 = vunpack.c.0.s8 %v515
      %v517 = vlaneseq
      %v518 = vshrl.u32 %v517, 7
      %v519 = vsub.s32 %v516, %v518
      %v520 = vrot.slane %v512, %v519
      %v522 = vunpack.c.l.s4 1983009808
      %v523 = vunpack.c.0.s8 %v522
      %v524 = vlaneseq
      %v525 = vshrl.u32 %v524, 7
      %v526 = vsub.s32 %v523, %v525
      %v527 = vrot.slane %v513, %v526
      %v528 = vcombine.low %v504, %v520
      %v529 = vcombine.high %v504, %v520
      %v531 = vunpack.c.l.s4 1934713408
      %v532 = vunpack.c.0.s8 %v531
      %v533 = vlaneseq
      %v534 = vshrl.u32 %v533, 7
      %v535 = vsub.s32 %v532, %v534
      %v536 = vrot.slane %v528, %v535
      %v538 = vunpack.c.l.s4 1934713408
      %v539 = vunpack.c.0.s8 %v538
      %v540 = vlaneseq
      %v541 = vshrl.u32 %v540, 7
      %v542 = vsub.s32 %v539, %v541
      %v543 = vrot.slane %v529, %v542
      %v544 = vcombine.low %v511, %v527
      %v545 = vcombine.high %v511, %v527
      %v547 = vunpack.c.l.s4 1934713408
      %v548 = vunpack.c.0.s8 %v547
      %v549 = vlaneseq
      %v550 = vshrl.u32 %v549, 7
      %v551 = vsub.s32 %v548, %v550
      %v552 = vrot.slane %v544, %v551
      %v554 = vunpack.c.l.s4 1934713408
      %v555 = vunpack.c.0.s8 %v554
      %v556 = vlaneseq
      %v557 = vshrl.u32 %v556, 7
      %v558 = vsub.s32 %v555, %v557
      %v559 = vrot.slane %v545, %v558
      %v560 = vcombine.high %v536, 0.0
      %v561 = vcombine.high %v543, 0.0
      %v562 = vcombine.high %v552, 0.0
      %v563 = vcombine.high %v559, 0.0
      %565 = vrot.lane.b32.xlu0 %v492, 16
      %v566 = vpop.permute.xlu0 %565
      %569 = vrot.lane.b32.xlu0 %v475, 32
      %v570 = vpop.permute.xlu0 %569
      %573 = vrot.lane.b32.xlu0 %v493, 48
      %v574 = vpop.permute.xlu0 %573
      %577 = vrot.lane.b32.xlu0 %v484, 64
      %v578 = vpop.permute.xlu0 %577
      %581 = vrot.lane.b32.xlu0 %v494, 80
      %v582 = vpop.permute.xlu0 %581
      %585 = vrot.lane.b32.xlu0 %v491, 96
      %v586 = vpop.permute.xlu0 %585
      %589 = vrot.lane.b32.xlu0 %v495, 112
      %v590 = vpop.permute.xlu0 %589
      %593 = vrot.lane.b32.xlu0 %v560, 16
      %v594 = vpop.permute.xlu0 %593
      %597 = vrot.lane.b32.xlu0 %v543, 32
      %v598 = vpop.permute.xlu0 %597
      %601 = vrot.lane.b32.xlu0 %v561, 48
      %v602 = vpop.permute.xlu0 %601
      %605 = vrot.lane.b32.xlu0 %v552, 64
      %v606 = vpop.permute.xlu0 %605
      %609 = vrot.lane.b32.xlu0 %v562, 80
      %v610 = vpop.permute.xlu0 %609
      %613 = vrot.lane.b32.xlu0 %v559, 96
      %v614 = vpop.permute.xlu0 %613
      %617 = vrot.lane.b32.xlu0 %v563, 112
      %v618 = vpop.permute.xlu0 %617
      %v620 = vsel %vm375, %v468, %v566
      %v621 = vsel %vm377, %v620, %v570
      %v622 = vsel %vm379, %v621, %v574
      %v623 = vsel %vm381, %v622, %v578
      %v624 = vsel %vm383, %v623, %v582
      %v625 = vsel %vm385, %v624, %v586
      %v626 = vsel %vm387, %v625, %v590
      %v627 = vsel %vm375, %v536, %v594
      %v628 = vsel %vm377, %v627, %v598
      %v629 = vsel %vm379, %v628, %v602
      %v630 = vsel %vm381, %v629, %v606
      %v631 = vsel %vm383, %v630, %v610
      %v632 = vsel %vm385, %v631, %v614
      %v633 = vsel %vm387, %v632, %v618
      %634 = vrot.lane.b32.xlu0 %v171, 126
      %v635 = vpop.permute.xlu0 %634
      %636 = vrot.lane.b32.xlu0 %v172, 126
      %v637 = vpop.permute.xlu0 %636
      %638 = vrot.lane.b32.xlu0 %v174, 126
      %v639 = vpop.permute.xlu0 %638
      %640 = vrot.lane.b32.xlu0 %v175, 126
      %v641 = vpop.permute.xlu0 %640
      %642 = vrot.lane.b32.xlu0 %v177, 126
      %v643 = vpop.permute.xlu0 %642
      %644 = vrot.lane.b32.xlu0 %v178, 126
      %v645 = vpop.permute.xlu0 %644
      %646 = vrot.lane.b32.xlu0 %v180, 126
      %v647 = vpop.permute.xlu0 %646
      %648 = vrot.lane.b32.xlu0 %v181, 126
      %v649 = vpop.permute.xlu0 %648
      %v658 = vcombine.low %v635, %v643
      %v659 = vcombine.high %v635, %v643
      %v661 = vunpack.c.l.s4 1983009808
      %v662 = vunpack.c.0.s8 %v661
      %v663 = vlaneseq
      %v664 = vshrl.u32 %v663, 7
      %v665 = vsub.s32 %v662, %v664
      %v666 = vrot.slane %v658, %v665
      %v668 = vunpack.c.l.s4 1983009808
      %v669 = vunpack.c.0.s8 %v668
      %v670 = vlaneseq
      %v671 = vshrl.u32 %v670, 7
      %v672 = vsub.s32 %v669, %v671
      %v673 = vrot.slane %v659, %v672
      %v674 = vcombine.low %v639, %v647
      %v675 = vcombine.high %v639, %v647
      %v677 = vunpack.c.l.s4 1983009808
      %v678 = vunpack.c.0.s8 %v677
      %v679 = vlaneseq
      %v680 = vshrl.u32 %v679, 7
      %v681 = vsub.s32 %v678, %v680
      %v682 = vrot.slane %v674, %v681
      %v684 = vunpack.c.l.s4 1983009808
      %v685 = vunpack.c.0.s8 %v684
      %v686 = vlaneseq
      %v687 = vshrl.u32 %v686, 7
      %v688 = vsub.s32 %v685, %v687
      %v689 = vrot.slane %v675, %v688
      %v690 = vcombine.low %v666, %v682
      %v691 = vcombine.high %v666, %v682
      %v693 = vunpack.c.l.s4 1934713408
      %v694 = vunpack.c.0.s8 %v693
      %v695 = vlaneseq
      %v696 = vshrl.u32 %v695, 7
      %v697 = vsub.s32 %v694, %v696
      %v698 = vrot.slane %v690, %v697
      %v700 = vunpack.c.l.s4 1934713408
      %v701 = vunpack.c.0.s8 %v700
      %v702 = vlaneseq
      %v703 = vshrl.u32 %v702, 7
      %v704 = vsub.s32 %v701, %v703
      %v705 = vrot.slane %v691, %v704
      %v706 = vcombine.low %v673, %v689
      %v707 = vcombine.high %v673, %v689
      %v709 = vunpack.c.l.s4 1934713408
      %v710 = vunpack.c.0.s8 %v709
      %v711 = vlaneseq
      %v712 = vshrl.u32 %v711, 7
      %v713 = vsub.s32 %v710, %v712
      %v714 = vrot.slane %v706, %v713
      %v716 = vunpack.c.l.s4 1934713408
      %v717 = vunpack.c.0.s8 %v716
      %v718 = vlaneseq
      %v719 = vshrl.u32 %v718, 7
      %v720 = vsub.s32 %v717, %v719
      %v721 = vrot.slane %v707, %v720
      %v722 = vcombine.high %v698, 0.0
      %v723 = vcombine.high %v705, 0.0
      %v724 = vcombine.high %v714, 0.0
      %v725 = vcombine.high %v721, 0.0
      %v726 = vcombine.low %v637, %v645
      %v727 = vcombine.high %v637, %v645
      %v729 = vunpack.c.l.s4 1983009808
      %v730 = vunpack.c.0.s8 %v729
      %v731 = vlaneseq
      %v732 = vshrl.u32 %v731, 7
      %v733 = vsub.s32 %v730, %v732
      %v734 = vrot.slane %v726, %v733
      %v736 = vunpack.c.l.s4 1983009808
      %v737 = vunpack.c.0.s8 %v736
      %v738 = vlaneseq
      %v739 = vshrl.u32 %v738, 7
      %v740 = vsub.s32 %v737, %v739
      %v741 = vrot.slane %v727, %v740
      %v742 = vcombine.low %v641, %v649
      %v743 = vcombine.high %v641, %v649
      %v745 = vunpack.c.l.s4 1983009808
      %v746 = vunpack.c.0.s8 %v745
      %v747 = vlaneseq
      %v748 = vshrl.u32 %v747, 7
      %v749 = vsub.s32 %v746, %v748
      %v750 = vrot.slane %v742, %v749
      %v752 = vunpack.c.l.s4 1983009808
      %v753 = vunpack.c.0.s8 %v752
      %v754 = vlaneseq
      %v755 = vshrl.u32 %v754, 7
      %v756 = vsub.s32 %v753, %v755
      %v757 = vrot.slane %v743, %v756
      %v758 = vcombine.low %v734, %v750
      %v759 = vcombine.high %v734, %v750
      %v761 = vunpack.c.l.s4 1934713408
      %v762 = vunpack.c.0.s8 %v761
      %v763 = vlaneseq
      %v764 = vshrl.u32 %v763, 7
      %v765 = vsub.s32 %v762, %v764
      %v766 = vrot.slane %v758, %v765
      %v768 = vunpack.c.l.s4 1934713408
      %v769 = vunpack.c.0.s8 %v768
      %v770 = vlaneseq
      %v771 = vshrl.u32 %v770, 7
      %v772 = vsub.s32 %v769, %v771
      %v773 = vrot.slane %v759, %v772
      %v774 = vcombine.low %v741, %v757
      %v775 = vcombine.high %v741, %v757
      %v777 = vunpack.c.l.s4 1934713408
      %v778 = vunpack.c.0.s8 %v777
      %v779 = vlaneseq
      %v780 = vshrl.u32 %v779, 7
      %v781 = vsub.s32 %v778, %v780
      %v782 = vrot.slane %v774, %v781
      %v784 = vunpack.c.l.s4 1934713408
      %v785 = vunpack.c.0.s8 %v784
      %v786 = vlaneseq
      %v787 = vshrl.u32 %v786, 7
      %v788 = vsub.s32 %v785, %v787
      %v789 = vrot.slane %v775, %v788
      %v790 = vcombine.high %v766, 0.0
      %v791 = vcombine.high %v773, 0.0
      %v792 = vcombine.high %v782, 0.0
      %v793 = vcombine.high %v789, 0.0
      %795 = vrot.lane.b32.xlu0 %v722, 16
      %v796 = vpop.permute.xlu0 %795
      %799 = vrot.lane.b32.xlu0 %v705, 32
      %v800 = vpop.permute.xlu0 %799
      %803 = vrot.lane.b32.xlu0 %v723, 48
      %v804 = vpop.permute.xlu0 %803
      %807 = vrot.lane.b32.xlu0 %v714, 64
      %v808 = vpop.permute.xlu0 %807
      %811 = vrot.lane.b32.xlu0 %v724, 80
      %v812 = vpop.permute.xlu0 %811
      %815 = vrot.lane.b32.xlu0 %v721, 96
      %v816 = vpop.permute.xlu0 %815
      %819 = vrot.lane.b32.xlu0 %v725, 112
      %v820 = vpop.permute.xlu0 %819
      %823 = vrot.lane.b32.xlu0 %v790, 16
      %v824 = vpop.permute.xlu0 %823
      %827 = vrot.lane.b32.xlu0 %v773, 32
      %v828 = vpop.permute.xlu0 %827
      %831 = vrot.lane.b32.xlu0 %v791, 48
      %v832 = vpop.permute.xlu0 %831
      %835 = vrot.lane.b32.xlu0 %v782, 64
      %v836 = vpop.permute.xlu0 %835
      %839 = vrot.lane.b32.xlu0 %v792, 80
      %v840 = vpop.permute.xlu0 %839
      %843 = vrot.lane.b32.xlu0 %v789, 96
      %v844 = vpop.permute.xlu0 %843
      %847 = vrot.lane.b32.xlu0 %v793, 112
      %v848 = vpop.permute.xlu0 %847
      %v850 = vsel %vm375, %v698, %v796
      %v851 = vsel %vm377, %v850, %v800
      %v852 = vsel %vm379, %v851, %v804
      %v853 = vsel %vm381, %v852, %v808
      %v854 = vsel %vm383, %v853, %v812
      %v855 = vsel %vm385, %v854, %v816
      %v856 = vsel %vm387, %v855, %v820
      %v857 = vsel %vm375, %v766, %v824
      %v858 = vsel %vm377, %v857, %v828
      %v859 = vsel %vm379, %v858, %v832
      %v860 = vsel %vm381, %v859, %v836
      %v861 = vsel %vm383, %v860, %v840
      %v862 = vsel %vm385, %v861, %v844
      %v863 = vsel %vm387, %v862, %v848
      %vm868 = vcmask 1046528
      %v869 = vrot.slane %v171, 1
      %v870 = vrot.slane %v172, 1
      %v871 = vsel %vm868, %v869, %v870
      %v872 = vrot.slane %v173, 1
      %v873 = vsel %vm868, %v870, %v872
      %v874 = vrot.slane %v174, 1
      %v875 = vrot.slane %v175, 1
      %v876 = vsel %vm868, %v874, %v875
      %v877 = vrot.slane %v176, 1
      %v878 = vsel %vm868, %v875, %v877
      %v879 = vrot.slane %v177, 1
      %v880 = vrot.slane %v178, 1
      %v881 = vsel %vm868, %v879, %v880
      %v882 = vrot.slane %v179, 1
      %v883 = vsel %vm868, %v880, %v882
      %v884 = vrot.slane %v180, 1
      %v885 = vrot.slane %v181, 1
      %v886 = vsel %vm868, %v884, %v885
      %v887 = vrot.slane %v182, 1
      %v888 = vsel %vm868, %v885, %v887
      %v897 = vcombine.low %v871, %v881
      %v898 = vcombine.high %v871, %v881
      %v900 = vunpack.c.l.s4 1983009808
      %v901 = vunpack.c.0.s8 %v900
      %v902 = vlaneseq
      %v903 = vshrl.u32 %v902, 7
      %v904 = vsub.s32 %v901, %v903
      %v905 = vrot.slane %v897, %v904
      %v907 = vunpack.c.l.s4 1983009808
      %v908 = vunpack.c.0.s8 %v907
      %v909 = vlaneseq
      %v910 = vshrl.u32 %v909, 7
      %v911 = vsub.s32 %v908, %v910
      %v912 = vrot.slane %v898, %v911
      %v913 = vcombine.low %v876, %v886
      %v914 = vcombine.high %v876, %v886
      %v916 = vunpack.c.l.s4 1983009808
      %v917 = vunpack.c.0.s8 %v916
      %v918 = vlaneseq
      %v919 = vshrl.u32 %v918, 7
      %v920 = vsub.s32 %v917, %v919
      %v921 = vrot.slane %v913, %v920
      %v923 = vunpack.c.l.s4 1983009808
      %v924 = vunpack.c.0.s8 %v923
      %v925 = vlaneseq
      %v926 = vshrl.u32 %v925, 7
      %v927 = vsub.s32 %v924, %v926
      %v928 = vrot.slane %v914, %v927
      %v929 = vcombine.low %v905, %v921
      %v930 = vcombine.high %v905, %v921
      %v932 = vunpack.c.l.s4 1934713408
      %v933 = vunpack.c.0.s8 %v932
      %v934 = vlaneseq
      %v935 = vshrl.u32 %v934, 7
      %v936 = vsub.s32 %v933, %v935
      %v937 = vrot.slane %v929, %v936
      %v939 = vunpack.c.l.s4 1934713408
      %v940 = vunpack.c.0.s8 %v939
      %v941 = vlaneseq
      %v942 = vshrl.u32 %v941, 7
      %v943 = vsub.s32 %v940, %v942
      %v944 = vrot.slane %v930, %v943
      %v945 = vcombine.low %v912, %v928
      %v946 = vcombine.high %v912, %v928
      %v948 = vunpack.c.l.s4 1934713408
      %v949 = vunpack.c.0.s8 %v948
      %v950 = vlaneseq
      %v951 = vshrl.u32 %v950, 7
      %v952 = vsub.s32 %v949, %v951
      %v953 = vrot.slane %v945, %v952
      %v955 = vunpack.c.l.s4 1934713408
      %v956 = vunpack.c.0.s8 %v955
      %v957 = vlaneseq
      %v958 = vshrl.u32 %v957, 7
      %v959 = vsub.s32 %v956, %v958
      %v960 = vrot.slane %v946, %v959
      %v961 = vcombine.high %v937, 0.0
      %v962 = vcombine.high %v944, 0.0
      %v963 = vcombine.high %v953, 0.0
      %v964 = vcombine.high %v960, 0.0
      %v965 = vcombine.low %v873, %v883
      %v966 = vcombine.high %v873, %v883
      %v968 = vunpack.c.l.s4 1983009808
      %v969 = vunpack.c.0.s8 %v968
      %v970 = vlaneseq
      %v971 = vshrl.u32 %v970, 7
      %v972 = vsub.s32 %v969, %v971
      %v973 = vrot.slane %v965, %v972
      %v975 = vunpack.c.l.s4 1983009808
      %v976 = vunpack.c.0.s8 %v975
      %v977 = vlaneseq
      %v978 = vshrl.u32 %v977, 7
      %v979 = vsub.s32 %v976, %v978
      %v980 = vrot.slane %v966, %v979
      %v981 = vcombine.low %v878, %v888
      %v982 = vcombine.high %v878, %v888
      %v984 = vunpack.c.l.s4 1983009808
      %v985 = vunpack.c.0.s8 %v984
      %v986 = vlaneseq
      %v987 = vshrl.u32 %v986, 7
      %v988 = vsub.s32 %v985, %v987
      %v989 = vrot.slane %v981, %v988
      %v991 = vunpack.c.l.s4 1983009808
      %v992 = vunpack.c.0.s8 %v991
      %v993 = vlaneseq
      %v994 = vshrl.u32 %v993, 7
      %v995 = vsub.s32 %v992, %v994
      %v996 = vrot.slane %v982, %v995
      %v997 = vcombine.low %v973, %v989
      %v998 = vcombine.high %v973, %v989
      %v1000 = vunpack.c.l.s4 1934713408
      %v1001 = vunpack.c.0.s8 %v1000
      %v1002 = vlaneseq
      %v1003 = vshrl.u32 %v1002, 7
      %v1004 = vsub.s32 %v1001, %v1003
      %v1005 = vrot.slane %v997, %v1004
      %v1007 = vunpack.c.l.s4 1934713408
      %v1008 = vunpack.c.0.s8 %v1007
      %v1009 = vlaneseq
      %v1010 = vshrl.u32 %v1009, 7
      %v1011 = vsub.s32 %v1008, %v1010
      %v1012 = vrot.slane %v998, %v1011
      %v1013 = vcombine.low %v980, %v996
      %v1014 = vcombine.high %v980, %v996
      %v1016 = vunpack.c.l.s4 1934713408
      %v1017 = vunpack.c.0.s8 %v1016
      %v1018 = vlaneseq
      %v1019 = vshrl.u32 %v1018, 7
      %v1020 = vsub.s32 %v1017, %v1019
      %v1021 = vrot.slane %v1013, %v1020
      %v1023 = vunpack.c.l.s4 1934713408
      %v1024 = vunpack.c.0.s8 %v1023
      %v1025 = vlaneseq
      %v1026 = vshrl.u32 %v1025, 7
      %v1027 = vsub.s32 %v1024, %v1026
      %v1028 = vrot.slane %v1014, %v1027
      %v1029 = vcombine.high %v1005, 0.0
      %v1030 = vcombine.high %v1012, 0.0
      %v1031 = vcombine.high %v1021, 0.0
      %v1032 = vcombine.high %v1028, 0.0
      %1034 = vrot.lane.b32.xlu0 %v961, 16
      %v1035 = vpop.permute.xlu0 %1034
      %1038 = vrot.lane.b32.xlu0 %v944, 32
      %v1039 = vpop.permute.xlu0 %1038
      %1042 = vrot.lane.b32.xlu0 %v962, 48
      %v1043 = vpop.permute.xlu0 %1042
      %1046 = vrot.lane.b32.xlu0 %v953, 64
      %v1047 = vpop.permute.xlu0 %1046
      %1050 = vrot.lane.b32.xlu0 %v963, 80
      %v1051 = vpop.permute.xlu0 %1050
      %1054 = vrot.lane.b32.xlu0 %v960, 96
      %v1055 = vpop.permute.xlu0 %1054
      %1058 = vrot.lane.b32.xlu0 %v964, 112
      %v1059 = vpop.permute.xlu0 %1058
      %1062 = vrot.lane.b32.xlu0 %v1029, 16
      %v1063 = vpop.permute.xlu0 %1062
      %1066 = vrot.lane.b32.xlu0 %v1012, 32
      %v1067 = vpop.permute.xlu0 %1066
      %1070 = vrot.lane.b32.xlu0 %v1030, 48
      %v1071 = vpop.permute.xlu0 %1070
      %1074 = vrot.lane.b32.xlu0 %v1021, 64
      %v1075 = vpop.permute.xlu0 %1074
      %1078 = vrot.lane.b32.xlu0 %v1031, 80
      %v1079 = vpop.permute.xlu0 %1078
      %1082 = vrot.lane.b32.xlu0 %v1028, 96
      %v1083 = vpop.permute.xlu0 %1082
      %1086 = vrot.lane.b32.xlu0 %v1032, 112
      %v1087 = vpop.permute.xlu0 %1086
      %v1089 = vsel %vm375, %v937, %v1035
      %v1090 = vsel %vm377, %v1089, %v1039
      %v1091 = vsel %vm379, %v1090, %v1043
      %v1092 = vsel %vm381, %v1091, %v1047
      %v1093 = vsel %vm383, %v1092, %v1051
      %v1094 = vsel %vm385, %v1093, %v1055
      %v1095 = vsel %vm387, %v1094, %v1059
      %v1096 = vsel %vm375, %v1005, %v1063
      %v1097 = vsel %vm377, %v1096, %v1067
      %v1098 = vsel %vm379, %v1097, %v1071
      %v1099 = vsel %vm381, %v1098, %v1075
      %v1100 = vsel %vm383, %v1099, %v1079
      %v1101 = vsel %vm385, %v1100, %v1083
      %v1102 = vsel %vm387, %v1101, %v1087
      %1103 = vrot.lane.b32.xlu0 %v871, 127
      %v1104 = vpop.permute.xlu0 %1103
      %1105 = vrot.lane.b32.xlu0 %v873, 127
      %v1106 = vpop.permute.xlu0 %1105
      %1107 = vrot.lane.b32.xlu0 %v876, 127
      %v1108 = vpop.permute.xlu0 %1107
      %1109 = vrot.lane.b32.xlu0 %v878, 127
      %v1110 = vpop.permute.xlu0 %1109
      %1111 = vrot.lane.b32.xlu0 %v881, 127
      %v1112 = vpop.permute.xlu0 %1111
      %1113 = vrot.lane.b32.xlu0 %v883, 127
      %v1114 = vpop.permute.xlu0 %1113
      %1115 = vrot.lane.b32.xlu0 %v886, 127
      %v1116 = vpop.permute.xlu0 %1115
      %1117 = vrot.lane.b32.xlu0 %v888, 127
      %v1118 = vpop.permute.xlu0 %1117
      %v1127 = vcombine.low %v1104, %v1112
      %v1128 = vcombine.high %v1104, %v1112
      %v1130 = vunpack.c.l.s4 1983009808
      %v1131 = vunpack.c.0.s8 %v1130
      %v1132 = vlaneseq
      %v1133 = vshrl.u32 %v1132, 7
      %v1134 = vsub.s32 %v1131, %v1133
      %v1135 = vrot.slane %v1127, %v1134
      %v1137 = vunpack.c.l.s4 1983009808
      %v1138 = vunpack.c.0.s8 %v1137
      %v1139 = vlaneseq
      %v1140 = vshrl.u32 %v1139, 7
      %v1141 = vsub.s32 %v1138, %v1140
      %v1142 = vrot.slane %v1128, %v1141
      %v1143 = vcombine.low %v1108, %v1116
      %v1144 = vcombine.high %v1108, %v1116
      %v1146 = vunpack.c.l.s4 1983009808
      %v1147 = vunpack.c.0.s8 %v1146
      %v1148 = vlaneseq
      %v1149 = vshrl.u32 %v1148, 7
      %v1150 = vsub.s32 %v1147, %v1149
      %v1151 = vrot.slane %v1143, %v1150
      %v1153 = vunpack.c.l.s4 1983009808
      %v1154 = vunpack.c.0.s8 %v1153
      %v1155 = vlaneseq
      %v1156 = vshrl.u32 %v1155, 7
      %v1157 = vsub.s32 %v1154, %v1156
      %v1158 = vrot.slane %v1144, %v1157
      %v1159 = vcombine.low %v1135, %v1151
      %v1160 = vcombine.high %v1135, %v1151
      %v1162 = vunpack.c.l.s4 1934713408
      %v1163 = vunpack.c.0.s8 %v1162
      %v1164 = vlaneseq
      %v1165 = vshrl.u32 %v1164, 7
      %v1166 = vsub.s32 %v1163, %v1165
      %v1167 = vrot.slane %v1159, %v1166
      %v1169 = vunpack.c.l.s4 1934713408
      %v1170 = vunpack.c.0.s8 %v1169
      %v1171 = vlaneseq
      %v1172 = vshrl.u32 %v1171, 7
      %v1173 = vsub.s32 %v1170, %v1172
      %v1174 = vrot.slane %v1160, %v1173
      %v1175 = vcombine.low %v1142, %v1158
      %v1176 = vcombine.high %v1142, %v1158
      %v1178 = vunpack.c.l.s4 1934713408
      %v1179 = vunpack.c.0.s8 %v1178
      %v1180 = vlaneseq
      %v1181 = vshrl.u32 %v1180, 7
      %v1182 = vsub.s32 %v1179, %v1181
      %v1183 = vrot.slane %v1175, %v1182
      %v1185 = vunpack.c.l.s4 1934713408
      %v1186 = vunpack.c.0.s8 %v1185
      %v1187 = vlaneseq
      %v1188 = vshrl.u32 %v1187, 7
      %v1189 = vsub.s32 %v1186, %v1188
      %v1190 = vrot.slane %v1176, %v1189
      %v1191 = vcombine.high %v1167, 0.0
      %v1192 = vcombine.high %v1174, 0.0
      %v1193 = vcombine.high %v1183, 0.0
      %v1194 = vcombine.high %v1190, 0.0
      %v1195 = vcombine.low %v1106, %v1114
      %v1196 = vcombine.high %v1106, %v1114
      %v1198 = vunpack.c.l.s4 1983009808
      %v1199 = vunpack.c.0.s8 %v1198
      %v1200 = vlaneseq
      %v1201 = vshrl.u32 %v1200, 7
      %v1202 = vsub.s32 %v1199, %v1201
      %v1203 = vrot.slane %v1195, %v1202
      %v1205 = vunpack.c.l.s4 1983009808
      %v1206 = vunpack.c.0.s8 %v1205
      %v1207 = vlaneseq
      %v1208 = vshrl.u32 %v1207, 7
      %v1209 = vsub.s32 %v1206, %v1208
      %v1210 = vrot.slane %v1196, %v1209
      %v1211 = vcombine.low %v1110, %v1118
      %v1212 = vcombine.high %v1110, %v1118
      %v1214 = vunpack.c.l.s4 1983009808
      %v1215 = vunpack.c.0.s8 %v1214
      %v1216 = vlaneseq
      %v1217 = vshrl.u32 %v1216, 7
      %v1218 = vsub.s32 %v1215, %v1217
      %v1219 = vrot.slane %v1211, %v1218
      %v1221 = vunpack.c.l.s4 1983009808
      %v1222 = vunpack.c.0.s8 %v1221
      %v1223 = vlaneseq
      %v1224 = vshrl.u32 %v1223, 7
      %v1225 = vsub.s32 %v1222, %v1224
      %v1226 = vrot.slane %v1212, %v1225
      %v1227 = vcombine.low %v1203, %v1219
      %v1228 = vcombine.high %v1203, %v1219
      %v1230 = vunpack.c.l.s4 1934713408
      %v1231 = vunpack.c.0.s8 %v1230
      %v1232 = vlaneseq
      %v1233 = vshrl.u32 %v1232, 7
      %v1234 = vsub.s32 %v1231, %v1233
      %v1235 = vrot.slane %v1227, %v1234
      %v1237 = vunpack.c.l.s4 1934713408
      %v1238 = vunpack.c.0.s8 %v1237
      %v1239 = vlaneseq
      %v1240 = vshrl.u32 %v1239, 7
      %v1241 = vsub.s32 %v1238, %v1240
      %v1242 = vrot.slane %v1228, %v1241
      %v1243 = vcombine.low %v1210, %v1226
      %v1244 = vcombine.high %v1210, %v1226
      %v1246 = vunpack.c.l.s4 1934713408
      %v1247 = vunpack.c.0.s8 %v1246
      %v1248 = vlaneseq
      %v1249 = vshrl.u32 %v1248, 7
      %v1250 = vsub.s32 %v1247, %v1249
      %v1251 = vrot.slane %v1243, %v1250
      %v1253 = vunpack.c.l.s4 1934713408
      %v1254 = vunpack.c.0.s8 %v1253
      %v1255 = vlaneseq
      %v1256 = vshrl.u32 %v1255, 7
      %v1257 = vsub.s32 %v1254, %v1256
      %v1258 = vrot.slane %v1244, %v1257
      %v1259 = vcombine.high %v1235, 0.0
      %v1260 = vcombine.high %v1242, 0.0
      %v1261 = vcombine.high %v1251, 0.0
      %v1262 = vcombine.high %v1258, 0.0
      %1264 = vrot.lane.b32.xlu0 %v1191, 16
      %v1265 = vpop.permute.xlu0 %1264
      %1268 = vrot.lane.b32.xlu0 %v1174, 32
      %v1269 = vpop.permute.xlu0 %1268
      %1272 = vrot.lane.b32.xlu0 %v1192, 48
      %v1273 = vpop.permute.xlu0 %1272
      %1276 = vrot.lane.b32.xlu0 %v1183, 64
      %v1277 = vpop.permute.xlu0 %1276
      %1280 = vrot.lane.b32.xlu0 %v1193, 80
      %v1281 = vpop.permute.xlu0 %1280
      %1284 = vrot.lane.b32.xlu0 %v1190, 96
      %v1285 = vpop.permute.xlu0 %1284
      %1288 = vrot.lane.b32.xlu0 %v1194, 112
      %v1289 = vpop.permute.xlu0 %1288
      %1292 = vrot.lane.b32.xlu0 %v1259, 16
      %v1293 = vpop.permute.xlu0 %1292
      %1296 = vrot.lane.b32.xlu0 %v1242, 32
      %v1297 = vpop.permute.xlu0 %1296
      %1300 = vrot.lane.b32.xlu0 %v1260, 48
      %v1301 = vpop.permute.xlu0 %1300
      %1304 = vrot.lane.b32.xlu0 %v1251, 64
      %v1305 = vpop.permute.xlu0 %1304
      %1308 = vrot.lane.b32.xlu0 %v1261, 80
      %v1309 = vpop.permute.xlu0 %1308
      %1312 = vrot.lane.b32.xlu0 %v1258, 96
      %v1313 = vpop.permute.xlu0 %1312
      %1316 = vrot.lane.b32.xlu0 %v1262, 112
      %v1317 = vpop.permute.xlu0 %1316
      %v1319 = vsel %vm375, %v1167, %v1265
      %v1320 = vsel %vm377, %v1319, %v1269
      %v1321 = vsel %vm379, %v1320, %v1273
      %v1322 = vsel %vm381, %v1321, %v1277
      %v1323 = vsel %vm383, %v1322, %v1281
      %v1324 = vsel %vm385, %v1323, %v1285
      %v1325 = vsel %vm387, %v1324, %v1289
      %v1326 = vsel %vm375, %v1235, %v1293
      %v1327 = vsel %vm377, %v1326, %v1297
      %v1328 = vsel %vm379, %v1327, %v1301
      %v1329 = vsel %vm381, %v1328, %v1305
      %v1330 = vsel %vm383, %v1329, %v1309
      %v1331 = vsel %vm385, %v1330, %v1313
      %v1332 = vsel %vm387, %v1331, %v1317
      %1333 = vrot.lane.b32.xlu0 %v871, 126
      %v1334 = vpop.permute.xlu0 %1333
      %1335 = vrot.lane.b32.xlu0 %v873, 126
      %v1336 = vpop.permute.xlu0 %1335
      %1337 = vrot.lane.b32.xlu0 %v876, 126
      %v1338 = vpop.permute.xlu0 %1337
      %1339 = vrot.lane.b32.xlu0 %v878, 126
      %v1340 = vpop.permute.xlu0 %1339
      %1341 = vrot.lane.b32.xlu0 %v881, 126
      %v1342 = vpop.permute.xlu0 %1341
      %1343 = vrot.lane.b32.xlu0 %v883, 126
      %v1344 = vpop.permute.xlu0 %1343
      %1345 = vrot.lane.b32.xlu0 %v886, 126
      %v1346 = vpop.permute.xlu0 %1345
      %1347 = vrot.lane.b32.xlu0 %v888, 126
      %v1348 = vpop.permute.xlu0 %1347
      %v1357 = vcombine.low %v1334, %v1342
      %v1358 = vcombine.high %v1334, %v1342
      %v1360 = vunpack.c.l.s4 1983009808
      %v1361 = vunpack.c.0.s8 %v1360
      %v1362 = vlaneseq
      %v1363 = vshrl.u32 %v1362, 7
      %v1364 = vsub.s32 %v1361, %v1363
      %v1365 = vrot.slane %v1357, %v1364
      %v1367 = vunpack.c.l.s4 1983009808
      %v1368 = vunpack.c.0.s8 %v1367
      %v1369 = vlaneseq
      %v1370 = vshrl.u32 %v1369, 7
      %v1371 = vsub.s32 %v1368, %v1370
      %v1372 = vrot.slane %v1358, %v1371
      %v1373 = vcombine.low %v1338, %v1346
      %v1374 = vcombine.high %v1338, %v1346
      %v1376 = vunpack.c.l.s4 1983009808
      %v1377 = vunpack.c.0.s8 %v1376
      %v1378 = vlaneseq
      %v1379 = vshrl.u32 %v1378, 7
      %v1380 = vsub.s32 %v1377, %v1379
      %v1381 = vrot.slane %v1373, %v1380
      %v1383 = vunpack.c.l.s4 1983009808
      %v1384 = vunpack.c.0.s8 %v1383
      %v1385 = vlaneseq
      %v1386 = vshrl.u32 %v1385, 7
      %v1387 = vsub.s32 %v1384, %v1386
      %v1388 = vrot.slane %v1374, %v1387
      %v1389 = vcombine.low %v1365, %v1381
      %v1390 = vcombine.high %v1365, %v1381
      %v1392 = vunpack.c.l.s4 1934713408
      %v1393 = vunpack.c.0.s8 %v1392
      %v1394 = vlaneseq
      %v1395 = vshrl.u32 %v1394, 7
      %v1396 = vsub.s32 %v1393, %v1395
      %v1397 = vrot.slane %v1389, %v1396
      %v1399 = vunpack.c.l.s4 1934713408
      %v1400 = vunpack.c.0.s8 %v1399
      %v1401 = vlaneseq
      %v1402 = vshrl.u32 %v1401, 7
      %v1403 = vsub.s32 %v1400, %v1402
      %v1404 = vrot.slane %v1390, %v1403
      %v1405 = vcombine.low %v1372, %v1388
      %v1406 = vcombine.high %v1372, %v1388
      %v1408 = vunpack.c.l.s4 1934713408
      %v1409 = vunpack.c.0.s8 %v1408
      %v1410 = vlaneseq
      %v1411 = vshrl.u32 %v1410, 7
      %v1412 = vsub.s32 %v1409, %v1411
      %v1413 = vrot.slane %v1405, %v1412
      %v1415 = vunpack.c.l.s4 1934713408
      %v1416 = vunpack.c.0.s8 %v1415
      %v1417 = vlaneseq
      %v1418 = vshrl.u32 %v1417, 7
      %v1419 = vsub.s32 %v1416, %v1418
      %v1420 = vrot.slane %v1406, %v1419
      %v1421 = vcombine.high %v1397, 0.0
      %v1422 = vcombine.high %v1404, 0.0
      %v1423 = vcombine.high %v1413, 0.0
      %v1424 = vcombine.high %v1420, 0.0
      %v1425 = vcombine.low %v1336, %v1344
      %v1426 = vcombine.high %v1336, %v1344
      %v1428 = vunpack.c.l.s4 1983009808
      %v1429 = vunpack.c.0.s8 %v1428
      %v1430 = vlaneseq
      %v1431 = vshrl.u32 %v1430, 7
      %v1432 = vsub.s32 %v1429, %v1431
      %v1433 = vrot.slane %v1425, %v1432
      %v1435 = vunpack.c.l.s4 1983009808
      %v1436 = vunpack.c.0.s8 %v1435
      %v1437 = vlaneseq
      %v1438 = vshrl.u32 %v1437, 7
      %v1439 = vsub.s32 %v1436, %v1438
      %v1440 = vrot.slane %v1426, %v1439
      %v1441 = vcombine.low %v1340, %v1348
      %v1442 = vcombine.high %v1340, %v1348
      %v1444 = vunpack.c.l.s4 1983009808
      %v1445 = vunpack.c.0.s8 %v1444
      %v1446 = vlaneseq
      %v1447 = vshrl.u32 %v1446, 7
      %v1448 = vsub.s32 %v1445, %v1447
      %v1449 = vrot.slane %v1441, %v1448
      %v1451 = vunpack.c.l.s4 1983009808
      %v1452 = vunpack.c.0.s8 %v1451
      %v1453 = vlaneseq
      %v1454 = vshrl.u32 %v1453, 7
      %v1455 = vsub.s32 %v1452, %v1454
      %v1456 = vrot.slane %v1442, %v1455
      %v1457 = vcombine.low %v1433, %v1449
      %v1458 = vcombine.high %v1433, %v1449
      %v1460 = vunpack.c.l.s4 1934713408
      %v1461 = vunpack.c.0.s8 %v1460
      %v1462 = vlaneseq
      %v1463 = vshrl.u32 %v1462, 7
      %v1464 = vsub.s32 %v1461, %v1463
      %v1465 = vrot.slane %v1457, %v1464
      %v1467 = vunpack.c.l.s4 1934713408
      %v1468 = vunpack.c.0.s8 %v1467
      %v1469 = vlaneseq
      %v1470 = vshrl.u32 %v1469, 7
      %v1471 = vsub.s32 %v1468, %v1470
      %v1472 = vrot.slane %v1458, %v1471
      %v1473 = vcombine.low %v1440, %v1456
      %v1474 = vcombine.high %v1440, %v1456
      %v1476 = vunpack.c.l.s4 1934713408
      %v1477 = vunpack.c.0.s8 %v1476
      %v1478 = vlaneseq
      %v1479 = vshrl.u32 %v1478, 7
      %v1480 = vsub.s32 %v1477, %v1479
      %v1481 = vrot.slane %v1473, %v1480
      %v1483 = vunpack.c.l.s4 1934713408
      %v1484 = vunpack.c.0.s8 %v1483
      %v1485 = vlaneseq
      %v1486 = vshrl.u32 %v1485, 7
      %v1487 = vsub.s32 %v1484, %v1486
      %v1488 = vrot.slane %v1474, %v1487
      %v1489 = vcombine.high %v1465, 0.0
      %v1490 = vcombine.high %v1472, 0.0
      %v1491 = vcombine.high %v1481, 0.0
      %v1492 = vcombine.high %v1488, 0.0
      %1494 = vrot.lane.b32.xlu0 %v1421, 16
      %v1495 = vpop.permute.xlu0 %1494
      %1498 = vrot.lane.b32.xlu0 %v1404, 32
      %v1499 = vpop.permute.xlu0 %1498
      %1502 = vrot.lane.b32.xlu0 %v1422, 48
      %v1503 = vpop.permute.xlu0 %1502
      %1506 = vrot.lane.b32.xlu0 %v1413, 64
      %v1507 = vpop.permute.xlu0 %1506
      %1510 = vrot.lane.b32.xlu0 %v1423, 80
      %v1511 = vpop.permute.xlu0 %1510
      %1514 = vrot.lane.b32.xlu0 %v1420, 96
      %v1515 = vpop.permute.xlu0 %1514
      %1518 = vrot.lane.b32.xlu0 %v1424, 112
      %v1519 = vpop.permute.xlu0 %1518
      %1522 = vrot.lane.b32.xlu0 %v1489, 16
      %v1523 = vpop.permute.xlu0 %1522
      %1526 = vrot.lane.b32.xlu0 %v1472, 32
      %v1527 = vpop.permute.xlu0 %1526
      %1530 = vrot.lane.b32.xlu0 %v1490, 48
      %v1531 = vpop.permute.xlu0 %1530
      %1534 = vrot.lane.b32.xlu0 %v1481, 64
      %v1535 = vpop.permute.xlu0 %1534
      %1538 = vrot.lane.b32.xlu0 %v1491, 80
      %v1539 = vpop.permute.xlu0 %1538
      %1542 = vrot.lane.b32.xlu0 %v1488, 96
      %v1543 = vpop.permute.xlu0 %1542
      %1546 = vrot.lane.b32.xlu0 %v1492, 112
      %v1547 = vpop.permute.xlu0 %1546
      %v1549 = vsel %vm375, %v1397, %v1495
      %v1550 = vsel %vm377, %v1549, %v1499
      %v1551 = vsel %vm379, %v1550, %v1503
      %v1552 = vsel %vm381, %v1551, %v1507
      %v1553 = vsel %vm383, %v1552, %v1511
      %v1554 = vsel %vm385, %v1553, %v1515
      %v1555 = vsel %vm387, %v1554, %v1519
      %v1556 = vsel %vm375, %v1465, %v1523
      %v1557 = vsel %vm377, %v1556, %v1527
      %v1558 = vsel %vm379, %v1557, %v1531
      %v1559 = vsel %vm381, %v1558, %v1535
      %v1560 = vsel %vm383, %v1559, %v1539
      %v1561 = vsel %vm385, %v1560, %v1543
      %v1562 = vsel %vm387, %v1561, %v1547
      %vm1563 = vcmask 1045504
      %v1564 = vrot.slane %v171, 2
      %v1565 = vrot.slane %v172, 2
      %v1566 = vsel %vm1563, %v1564, %v1565
      %v1567 = vrot.slane %v173, 2
      %v1568 = vsel %vm1563, %v1565, %v1567
      %v1569 = vrot.slane %v174, 2
      %v1570 = vrot.slane %v175, 2
      %v1571 = vsel %vm1563, %v1569, %v1570
      %v1572 = vrot.slane %v176, 2
      %v1573 = vsel %vm1563, %v1570, %v1572
      %v1574 = vrot.slane %v177, 2
      %v1575 = vrot.slane %v178, 2
      %v1576 = vsel %vm1563, %v1574, %v1575
      %v1577 = vrot.slane %v179, 2
      %v1578 = vsel %vm1563, %v1575, %v1577
      %v1579 = vrot.slane %v180, 2
      %v1580 = vrot.slane %v181, 2
      %v1581 = vsel %vm1563, %v1579, %v1580
      %v1582 = vrot.slane %v182, 2
      %v1583 = vsel %vm1563, %v1580, %v1582
      %v1592 = vcombine.low %v1566, %v1576
      %v1593 = vcombine.high %v1566, %v1576
      %v1595 = vunpack.c.l.s4 1983009808
      %v1596 = vunpack.c.0.s8 %v1595
      %v1597 = vlaneseq
      %v1598 = vshrl.u32 %v1597, 7
      %v1599 = vsub.s32 %v1596, %v1598
      %v1600 = vrot.slane %v1592, %v1599
      %v1602 = vunpack.c.l.s4 1983009808
      %v1603 = vunpack.c.0.s8 %v1602
      %v1604 = vlaneseq
      %v1605 = vshrl.u32 %v1604, 7
      %v1606 = vsub.s32 %v1603, %v1605
      %v1607 = vrot.slane %v1593, %v1606
      %v1608 = vcombine.low %v1571, %v1581
      %v1609 = vcombine.high %v1571, %v1581
      %v1611 = vunpack.c.l.s4 1983009808
      %v1612 = vunpack.c.0.s8 %v1611
      %v1613 = vlaneseq
      %v1614 = vshrl.u32 %v1613, 7
      %v1615 = vsub.s32 %v1612, %v1614
      %v1616 = vrot.slane %v1608, %v1615
      %v1618 = vunpack.c.l.s4 1983009808
      %v1619 = vunpack.c.0.s8 %v1618
      %v1620 = vlaneseq
      %v1621 = vshrl.u32 %v1620, 7
      %v1622 = vsub.s32 %v1619, %v1621
      %v1623 = vrot.slane %v1609, %v1622
      %v1624 = vcombine.low %v1600, %v1616
      %v1625 = vcombine.high %v1600, %v1616
      %v1627 = vunpack.c.l.s4 1934713408
      %v1628 = vunpack.c.0.s8 %v1627
      %v1629 = vlaneseq
      %v1630 = vshrl.u32 %v1629, 7
      %v1631 = vsub.s32 %v1628, %v1630
      %v1632 = vrot.slane %v1624, %v1631
      %v1634 = vunpack.c.l.s4 1934713408
      %v1635 = vunpack.c.0.s8 %v1634
      %v1636 = vlaneseq
      %v1637 = vshrl.u32 %v1636, 7
      %v1638 = vsub.s32 %v1635, %v1637
      %v1639 = vrot.slane %v1625, %v1638
      %v1640 = vcombine.low %v1607, %v1623
      %v1641 = vcombine.high %v1607, %v1623
      %v1643 = vunpack.c.l.s4 1934713408
      %v1644 = vunpack.c.0.s8 %v1643
      %v1645 = vlaneseq
      %v1646 = vshrl.u32 %v1645, 7
      %v1647 = vsub.s32 %v1644, %v1646
      %v1648 = vrot.slane %v1640, %v1647
      %v1650 = vunpack.c.l.s4 1934713408
      %v1651 = vunpack.c.0.s8 %v1650
      %v1652 = vlaneseq
      %v1653 = vshrl.u32 %v1652, 7
      %v1654 = vsub.s32 %v1651, %v1653
      %v1655 = vrot.slane %v1641, %v1654
      %v1656 = vcombine.high %v1632, 0.0
      %v1657 = vcombine.high %v1639, 0.0
      %v1658 = vcombine.high %v1648, 0.0
      %v1659 = vcombine.high %v1655, 0.0
      %v1660 = vcombine.low %v1568, %v1578
      %v1661 = vcombine.high %v1568, %v1578
      %v1663 = vunpack.c.l.s4 1983009808
      %v1664 = vunpack.c.0.s8 %v1663
      %v1665 = vlaneseq
      %v1666 = vshrl.u32 %v1665, 7
      %v1667 = vsub.s32 %v1664, %v1666
      %v1668 = vrot.slane %v1660, %v1667
      %v1670 = vunpack.c.l.s4 1983009808
      %v1671 = vunpack.c.0.s8 %v1670
      %v1672 = vlaneseq
      %v1673 = vshrl.u32 %v1672, 7
      %v1674 = vsub.s32 %v1671, %v1673
      %v1675 = vrot.slane %v1661, %v1674
      %v1676 = vcombine.low %v1573, %v1583
      %v1677 = vcombine.high %v1573, %v1583
      %v1679 = vunpack.c.l.s4 1983009808
      %v1680 = vunpack.c.0.s8 %v1679
      %v1681 = vlaneseq
      %v1682 = vshrl.u32 %v1681, 7
      %v1683 = vsub.s32 %v1680, %v1682
      %v1684 = vrot.slane %v1676, %v1683
      %v1686 = vunpack.c.l.s4 1983009808
      %v1687 = vunpack.c.0.s8 %v1686
      %v1688 = vlaneseq
      %v1689 = vshrl.u32 %v1688, 7
      %v1690 = vsub.s32 %v1687, %v1689
      %v1691 = vrot.slane %v1677, %v1690
      %v1692 = vcombine.low %v1668, %v1684
      %v1693 = vcombine.high %v1668, %v1684
      %v1695 = vunpack.c.l.s4 1934713408
      %v1696 = vunpack.c.0.s8 %v1695
      %v1697 = vlaneseq
      %v1698 = vshrl.u32 %v1697, 7
      %v1699 = vsub.s32 %v1696, %v1698
      %v1700 = vrot.slane %v1692, %v1699
      %v1702 = vunpack.c.l.s4 1934713408
      %v1703 = vunpack.c.0.s8 %v1702
      %v1704 = vlaneseq
      %v1705 = vshrl.u32 %v1704, 7
      %v1706 = vsub.s32 %v1703, %v1705
      %v1707 = vrot.slane %v1693, %v1706
      %v1708 = vcombine.low %v1675, %v1691
      %v1709 = vcombine.high %v1675, %v1691
      %v1711 = vunpack.c.l.s4 1934713408
      %v1712 = vunpack.c.0.s8 %v1711
      %v1713 = vlaneseq
      %v1714 = vshrl.u32 %v1713, 7
      %v1715 = vsub.s32 %v1712, %v1714
      %v1716 = vrot.slane %v1708, %v1715
      %v1718 = vunpack.c.l.s4 1934713408
      %v1719 = vunpack.c.0.s8 %v1718
      %v1720 = vlaneseq
      %v1721 = vshrl.u32 %v1720, 7
      %v1722 = vsub.s32 %v1719, %v1721
      %v1723 = vrot.slane %v1709, %v1722
      %v1724 = vcombine.high %v1700, 0.0
      %v1725 = vcombine.high %v1707, 0.0
      %v1726 = vcombine.high %v1716, 0.0
      %v1727 = vcombine.high %v1723, 0.0
      %1729 = vrot.lane.b32.xlu0 %v1656, 16
      %v1730 = vpop.permute.xlu0 %1729
      %1733 = vrot.lane.b32.xlu0 %v1639, 32
      %v1734 = vpop.permute.xlu0 %1733
      %1737 = vrot.lane.b32.xlu0 %v1657, 48
      %v1738 = vpop.permute.xlu0 %1737
      %1741 = vrot.lane.b32.xlu0 %v1648, 64
      %v1742 = vpop.permute.xlu0 %1741
      %1745 = vrot.lane.b32.xlu0 %v1658, 80
      %v1746 = vpop.permute.xlu0 %1745
      %1749 = vrot.lane.b32.xlu0 %v1655, 96
      %v1750 = vpop.permute.xlu0 %1749
      %1753 = vrot.lane.b32.xlu0 %v1659, 112
      %v1754 = vpop.permute.xlu0 %1753
      %1757 = vrot.lane.b32.xlu0 %v1724, 16
      %v1758 = vpop.permute.xlu0 %1757
      %1761 = vrot.lane.b32.xlu0 %v1707, 32
      %v1762 = vpop.permute.xlu0 %1761
      %1765 = vrot.lane.b32.xlu0 %v1725, 48
      %v1766 = vpop.permute.xlu0 %1765
      %1769 = vrot.lane.b32.xlu0 %v1716, 64
      %v1770 = vpop.permute.xlu0 %1769
      %1773 = vrot.lane.b32.xlu0 %v1726, 80
      %v1774 = vpop.permute.xlu0 %1773
      %1777 = vrot.lane.b32.xlu0 %v1723, 96
      %v1778 = vpop.permute.xlu0 %1777
      %1781 = vrot.lane.b32.xlu0 %v1727, 112
      %v1782 = vpop.permute.xlu0 %1781
      %v1784 = vsel %vm375, %v1632, %v1730
      %v1785 = vsel %vm377, %v1784, %v1734
      %v1786 = vsel %vm379, %v1785, %v1738
      %v1787 = vsel %vm381, %v1786, %v1742
      %v1788 = vsel %vm383, %v1787, %v1746
      %v1789 = vsel %vm385, %v1788, %v1750
      %v1790 = vsel %vm387, %v1789, %v1754
      %v1791 = vsel %vm375, %v1700, %v1758
      %v1792 = vsel %vm377, %v1791, %v1762
      %v1793 = vsel %vm379, %v1792, %v1766
      %v1794 = vsel %vm381, %v1793, %v1770
      %v1795 = vsel %vm383, %v1794, %v1774
      %v1796 = vsel %vm385, %v1795, %v1778
      %v1797 = vsel %vm387, %v1796, %v1782
      %1798 = vrot.lane.b32.xlu0 %v1566, 127
      %v1799 = vpop.permute.xlu0 %1798
      %1800 = vrot.lane.b32.xlu0 %v1568, 127
      %v1801 = vpop.permute.xlu0 %1800
      %1802 = vrot.lane.b32.xlu0 %v1571, 127
      %v1803 = vpop.permute.xlu0 %1802
      %1804 = vrot.lane.b32.xlu0 %v1573, 127
      %v1805 = vpop.permute.xlu0 %1804
      %1806 = vrot.lane.b32.xlu0 %v1576, 127
      %v1807 = vpop.permute.xlu0 %1806
      %1808 = vrot.lane.b32.xlu0 %v1578, 127
      %v1809 = vpop.permute.xlu0 %1808
      %1810 = vrot.lane.b32.xlu0 %v1581, 127
      %v1811 = vpop.permute.xlu0 %1810
      %1812 = vrot.lane.b32.xlu0 %v1583, 127
      %v1813 = vpop.permute.xlu0 %1812
      %v1822 = vcombine.low %v1799, %v1807
      %v1823 = vcombine.high %v1799, %v1807
      %v1825 = vunpack.c.l.s4 1983009808
      %v1826 = vunpack.c.0.s8 %v1825
      %v1827 = vlaneseq
      %v1828 = vshrl.u32 %v1827, 7
      %v1829 = vsub.s32 %v1826, %v1828
      %v1830 = vrot.slane %v1822, %v1829
      %v1832 = vunpack.c.l.s4 1983009808
      %v1833 = vunpack.c.0.s8 %v1832
      %v1834 = vlaneseq
      %v1835 = vshrl.u32 %v1834, 7
      %v1836 = vsub.s32 %v1833, %v1835
      %v1837 = vrot.slane %v1823, %v1836
      %v1838 = vcombine.low %v1803, %v1811
      %v1839 = vcombine.high %v1803, %v1811
      %v1841 = vunpack.c.l.s4 1983009808
      %v1842 = vunpack.c.0.s8 %v1841
      %v1843 = vlaneseq
      %v1844 = vshrl.u32 %v1843, 7
      %v1845 = vsub.s32 %v1842, %v1844
      %v1846 = vrot.slane %v1838, %v1845
      %v1848 = vunpack.c.l.s4 1983009808
      %v1849 = vunpack.c.0.s8 %v1848
      %v1850 = vlaneseq
      %v1851 = vshrl.u32 %v1850, 7
      %v1852 = vsub.s32 %v1849, %v1851
      %v1853 = vrot.slane %v1839, %v1852
      %v1854 = vcombine.low %v1830, %v1846
      %v1855 = vcombine.high %v1830, %v1846
      %v1857 = vunpack.c.l.s4 1934713408
      %v1858 = vunpack.c.0.s8 %v1857
      %v1859 = vlaneseq
      %v1860 = vshrl.u32 %v1859, 7
      %v1861 = vsub.s32 %v1858, %v1860
      %v1862 = vrot.slane %v1854, %v1861
      %v1864 = vunpack.c.l.s4 1934713408
      %v1865 = vunpack.c.0.s8 %v1864
      %v1866 = vlaneseq
      %v1867 = vshrl.u32 %v1866, 7
      %v1868 = vsub.s32 %v1865, %v1867
      %v1869 = vrot.slane %v1855, %v1868
      %v1870 = vcombine.low %v1837, %v1853
      %v1871 = vcombine.high %v1837, %v1853
      %v1873 = vunpack.c.l.s4 1934713408
      %v1874 = vunpack.c.0.s8 %v1873
      %v1875 = vlaneseq
      %v1876 = vshrl.u32 %v1875, 7
      %v1877 = vsub.s32 %v1874, %v1876
      %v1878 = vrot.slane %v1870, %v1877
      %v1880 = vunpack.c.l.s4 1934713408
      %v1881 = vunpack.c.0.s8 %v1880
      %v1882 = vlaneseq
      %v1883 = vshrl.u32 %v1882, 7
      %v1884 = vsub.s32 %v1881, %v1883
      %v1885 = vrot.slane %v1871, %v1884
      %v1886 = vcombine.high %v1862, 0.0
      %v1887 = vcombine.high %v1869, 0.0
      %v1888 = vcombine.high %v1878, 0.0
      %v1889 = vcombine.high %v1885, 0.0
      %v1890 = vcombine.low %v1801, %v1809
      %v1891 = vcombine.high %v1801, %v1809
      %v1893 = vunpack.c.l.s4 1983009808
      %v1894 = vunpack.c.0.s8 %v1893
      %v1895 = vlaneseq
      %v1896 = vshrl.u32 %v1895, 7
      %v1897 = vsub.s32 %v1894, %v1896
      %v1898 = vrot.slane %v1890, %v1897
      %v1900 = vunpack.c.l.s4 1983009808
      %v1901 = vunpack.c.0.s8 %v1900
      %v1902 = vlaneseq
      %v1903 = vshrl.u32 %v1902, 7
      %v1904 = vsub.s32 %v1901, %v1903
      %v1905 = vrot.slane %v1891, %v1904
      %v1906 = vcombine.low %v1805, %v1813
      %v1907 = vcombine.high %v1805, %v1813
      %v1909 = vunpack.c.l.s4 1983009808
      %v1910 = vunpack.c.0.s8 %v1909
      %v1911 = vlaneseq
      %v1912 = vshrl.u32 %v1911, 7
      %v1913 = vsub.s32 %v1910, %v1912
      %v1914 = vrot.slane %v1906, %v1913
      %v1916 = vunpack.c.l.s4 1983009808
      %v1917 = vunpack.c.0.s8 %v1916
      %v1918 = vlaneseq
      %v1919 = vshrl.u32 %v1918, 7
      %v1920 = vsub.s32 %v1917, %v1919
      %v1921 = vrot.slane %v1907, %v1920
      %v1922 = vcombine.low %v1898, %v1914
      %v1923 = vcombine.high %v1898, %v1914
      %v1925 = vunpack.c.l.s4 1934713408
      %v1926 = vunpack.c.0.s8 %v1925
      %v1927 = vlaneseq
      %v1928 = vshrl.u32 %v1927, 7
      %v1929 = vsub.s32 %v1926, %v1928
      %v1930 = vrot.slane %v1922, %v1929
      %v1932 = vunpack.c.l.s4 1934713408
      %v1933 = vunpack.c.0.s8 %v1932
      %v1934 = vlaneseq
      %v1935 = vshrl.u32 %v1934, 7
      %v1936 = vsub.s32 %v1933, %v1935
      %v1937 = vrot.slane %v1923, %v1936
      %v1938 = vcombine.low %v1905, %v1921
      %v1939 = vcombine.high %v1905, %v1921
      %v1941 = vunpack.c.l.s4 1934713408
      %v1942 = vunpack.c.0.s8 %v1941
      %v1943 = vlaneseq
      %v1944 = vshrl.u32 %v1943, 7
      %v1945 = vsub.s32 %v1942, %v1944
      %v1946 = vrot.slane %v1938, %v1945
      %v1948 = vunpack.c.l.s4 1934713408
      %v1949 = vunpack.c.0.s8 %v1948
      %v1950 = vlaneseq
      %v1951 = vshrl.u32 %v1950, 7
      %v1952 = vsub.s32 %v1949, %v1951
      %v1953 = vrot.slane %v1939, %v1952
      %v1954 = vcombine.high %v1930, 0.0
      %v1955 = vcombine.high %v1937, 0.0
      %v1956 = vcombine.high %v1946, 0.0
      %v1957 = vcombine.high %v1953, 0.0
      %1959 = vrot.lane.b32.xlu0 %v1886, 16
      %v1960 = vpop.permute.xlu0 %1959
      %1963 = vrot.lane.b32.xlu0 %v1869, 32
      %v1964 = vpop.permute.xlu0 %1963
      %1967 = vrot.lane.b32.xlu0 %v1887, 48
      %v1968 = vpop.permute.xlu0 %1967
      %1971 = vrot.lane.b32.xlu0 %v1878, 64
      %v1972 = vpop.permute.xlu0 %1971
      %1975 = vrot.lane.b32.xlu0 %v1888, 80
      %v1976 = vpop.permute.xlu0 %1975
      %1979 = vrot.lane.b32.xlu0 %v1885, 96
      %v1980 = vpop.permute.xlu0 %1979
      %1983 = vrot.lane.b32.xlu0 %v1889, 112
      %v1984 = vpop.permute.xlu0 %1983
      %1987 = vrot.lane.b32.xlu0 %v1954, 16
      %v1988 = vpop.permute.xlu0 %1987
      %1991 = vrot.lane.b32.xlu0 %v1937, 32
      %v1992 = vpop.permute.xlu0 %1991
      %1995 = vrot.lane.b32.xlu0 %v1955, 48
      %v1996 = vpop.permute.xlu0 %1995
      %1999 = vrot.lane.b32.xlu0 %v1946, 64
      %v2000 = vpop.permute.xlu0 %1999
      %2003 = vrot.lane.b32.xlu0 %v1956, 80
      %v2004 = vpop.permute.xlu0 %2003
      %2007 = vrot.lane.b32.xlu0 %v1953, 96
      %v2008 = vpop.permute.xlu0 %2007
      %2011 = vrot.lane.b32.xlu0 %v1957, 112
      %v2012 = vpop.permute.xlu0 %2011
      %v2014 = vsel %vm375, %v1862, %v1960
      %v2015 = vsel %vm377, %v2014, %v1964
      %v2016 = vsel %vm379, %v2015, %v1968
      %v2017 = vsel %vm381, %v2016, %v1972
      %v2018 = vsel %vm383, %v2017, %v1976
      %v2019 = vsel %vm385, %v2018, %v1980
      %v2020 = vsel %vm387, %v2019, %v1984
      %v2021 = vsel %vm375, %v1930, %v1988
      %v2022 = vsel %vm377, %v2021, %v1992
      %v2023 = vsel %vm379, %v2022, %v1996
      %v2024 = vsel %vm381, %v2023, %v2000
      %v2025 = vsel %vm383, %v2024, %v2004
      %v2026 = vsel %vm385, %v2025, %v2008
      %v2027 = vsel %vm387, %v2026, %v2012
      %2028 = vrot.lane.b32.xlu0 %v1566, 126
      %v2029 = vpop.permute.xlu0 %2028
      %2030 = vrot.lane.b32.xlu0 %v1568, 126
      %v2031 = vpop.permute.xlu0 %2030
      %2032 = vrot.lane.b32.xlu0 %v1571, 126
      %v2033 = vpop.permute.xlu0 %2032
      %2034 = vrot.lane.b32.xlu0 %v1573, 126
      %v2035 = vpop.permute.xlu0 %2034
      %2036 = vrot.lane.b32.xlu0 %v1576, 126
      %v2037 = vpop.permute.xlu0 %2036
      %2038 = vrot.lane.b32.xlu0 %v1578, 126
      %v2039 = vpop.permute.xlu0 %2038
      %2040 = vrot.lane.b32.xlu0 %v1581, 126
      %v2041 = vpop.permute.xlu0 %2040
      %2042 = vrot.lane.b32.xlu0 %v1583, 126
      %v2043 = vpop.permute.xlu0 %2042
      %v2052 = vcombine.low %v2029, %v2037
      %v2053 = vcombine.high %v2029, %v2037
      %v2055 = vunpack.c.l.s4 1983009808
      %v2056 = vunpack.c.0.s8 %v2055
      %v2057 = vlaneseq
      %v2058 = vshrl.u32 %v2057, 7
      %v2059 = vsub.s32 %v2056, %v2058
      %v2060 = vrot.slane %v2052, %v2059
      %v2062 = vunpack.c.l.s4 1983009808
      %v2063 = vunpack.c.0.s8 %v2062
      %v2064 = vlaneseq
      %v2065 = vshrl.u32 %v2064, 7
      %v2066 = vsub.s32 %v2063, %v2065
      %v2067 = vrot.slane %v2053, %v2066
      %v2068 = vcombine.low %v2033, %v2041
      %v2069 = vcombine.high %v2033, %v2041
      %v2071 = vunpack.c.l.s4 1983009808
      %v2072 = vunpack.c.0.s8 %v2071
      %v2073 = vlaneseq
      %v2074 = vshrl.u32 %v2073, 7
      %v2075 = vsub.s32 %v2072, %v2074
      %v2076 = vrot.slane %v2068, %v2075
      %v2078 = vunpack.c.l.s4 1983009808
      %v2079 = vunpack.c.0.s8 %v2078
      %v2080 = vlaneseq
      %v2081 = vshrl.u32 %v2080, 7
      %v2082 = vsub.s32 %v2079, %v2081
      %v2083 = vrot.slane %v2069, %v2082
      %v2084 = vcombine.low %v2060, %v2076
      %v2085 = vcombine.high %v2060, %v2076
      %v2087 = vunpack.c.l.s4 1934713408
      %v2088 = vunpack.c.0.s8 %v2087
      %v2089 = vlaneseq
      %v2090 = vshrl.u32 %v2089, 7
      %v2091 = vsub.s32 %v2088, %v2090
      %v2092 = vrot.slane %v2084, %v2091
      %v2094 = vunpack.c.l.s4 1934713408
      %v2095 = vunpack.c.0.s8 %v2094
      %v2096 = vlaneseq
      %v2097 = vshrl.u32 %v2096, 7
      %v2098 = vsub.s32 %v2095, %v2097
      %v2099 = vrot.slane %v2085, %v2098
      %v2100 = vcombine.low %v2067, %v2083
      %v2101 = vcombine.high %v2067, %v2083
      %v2103 = vunpack.c.l.s4 1934713408
      %v2104 = vunpack.c.0.s8 %v2103
      %v2105 = vlaneseq
      %v2106 = vshrl.u32 %v2105, 7
      %v2107 = vsub.s32 %v2104, %v2106
      %v2108 = vrot.slane %v2100, %v2107
      %v2110 = vunpack.c.l.s4 1934713408
      %v2111 = vunpack.c.0.s8 %v2110
      %v2112 = vlaneseq
      %v2113 = vshrl.u32 %v2112, 7
      %v2114 = vsub.s32 %v2111, %v2113
      %v2115 = vrot.slane %v2101, %v2114
      %v2116 = vcombine.high %v2092, 0.0
      %v2117 = vcombine.high %v2099, 0.0
      %v2118 = vcombine.high %v2108, 0.0
      %v2119 = vcombine.high %v2115, 0.0
      %v2120 = vcombine.low %v2031, %v2039
      %v2121 = vcombine.high %v2031, %v2039
      %v2123 = vunpack.c.l.s4 1983009808
      %v2124 = vunpack.c.0.s8 %v2123
      %v2125 = vlaneseq
      %v2126 = vshrl.u32 %v2125, 7
      %v2127 = vsub.s32 %v2124, %v2126
      %v2128 = vrot.slane %v2120, %v2127
      %v2130 = vunpack.c.l.s4 1983009808
      %v2131 = vunpack.c.0.s8 %v2130
      %v2132 = vlaneseq
      %v2133 = vshrl.u32 %v2132, 7
      %v2134 = vsub.s32 %v2131, %v2133
      %v2135 = vrot.slane %v2121, %v2134
      %v2136 = vcombine.low %v2035, %v2043
      %v2137 = vcombine.high %v2035, %v2043
      %v2139 = vunpack.c.l.s4 1983009808
      %v2140 = vunpack.c.0.s8 %v2139
      %v2141 = vlaneseq
      %v2142 = vshrl.u32 %v2141, 7
      %v2143 = vsub.s32 %v2140, %v2142
      %v2144 = vrot.slane %v2136, %v2143
      %v2146 = vunpack.c.l.s4 1983009808
      %v2147 = vunpack.c.0.s8 %v2146
      %v2148 = vlaneseq
      %v2149 = vshrl.u32 %v2148, 7
      %v2150 = vsub.s32 %v2147, %v2149
      %v2151 = vrot.slane %v2137, %v2150
      %v2152 = vcombine.low %v2128, %v2144
      %v2153 = vcombine.high %v2128, %v2144
      %v2155 = vunpack.c.l.s4 1934713408
      %v2156 = vunpack.c.0.s8 %v2155
      %v2157 = vlaneseq
      %v2158 = vshrl.u32 %v2157, 7
      %v2159 = vsub.s32 %v2156, %v2158
      %v2160 = vrot.slane %v2152, %v2159
      %v2162 = vunpack.c.l.s4 1934713408
      %v2163 = vunpack.c.0.s8 %v2162
      %v2164 = vlaneseq
      %v2165 = vshrl.u32 %v2164, 7
      %v2166 = vsub.s32 %v2163, %v2165
      %v2167 = vrot.slane %v2153, %v2166
      %v2168 = vcombine.low %v2135, %v2151
      %v2169 = vcombine.high %v2135, %v2151
      %v2171 = vunpack.c.l.s4 1934713408
      %v2172 = vunpack.c.0.s8 %v2171
      %v2173 = vlaneseq
      %v2174 = vshrl.u32 %v2173, 7
      %v2175 = vsub.s32 %v2172, %v2174
      %v2176 = vrot.slane %v2168, %v2175
      %v2178 = vunpack.c.l.s4 1934713408
      %v2179 = vunpack.c.0.s8 %v2178
      %v2180 = vlaneseq
      %v2181 = vshrl.u32 %v2180, 7
      %v2182 = vsub.s32 %v2179, %v2181
      %v2183 = vrot.slane %v2169, %v2182
      %v2184 = vcombine.high %v2160, 0.0
      %v2185 = vcombine.high %v2167, 0.0
      %v2186 = vcombine.high %v2176, 0.0
      %v2187 = vcombine.high %v2183, 0.0
      %2189 = vrot.lane.b32.xlu0 %v2116, 16
      %v2190 = vpop.permute.xlu0 %2189
      %2193 = vrot.lane.b32.xlu0 %v2099, 32
      %v2194 = vpop.permute.xlu0 %2193
      %2197 = vrot.lane.b32.xlu0 %v2117, 48
      %v2198 = vpop.permute.xlu0 %2197
      %2201 = vrot.lane.b32.xlu0 %v2108, 64
      %v2202 = vpop.permute.xlu0 %2201
      %2205 = vrot.lane.b32.xlu0 %v2118, 80
      %v2206 = vpop.permute.xlu0 %2205
      %2209 = vrot.lane.b32.xlu0 %v2115, 96
      %v2210 = vpop.permute.xlu0 %2209
      %2213 = vrot.lane.b32.xlu0 %v2119, 112
      %v2214 = vpop.permute.xlu0 %2213
      %2217 = vrot.lane.b32.xlu0 %v2184, 16
      %v2218 = vpop.permute.xlu0 %2217
      %2221 = vrot.lane.b32.xlu0 %v2167, 32
      %v2222 = vpop.permute.xlu0 %2221
      %2225 = vrot.lane.b32.xlu0 %v2185, 48
      %v2226 = vpop.permute.xlu0 %2225
      %2229 = vrot.lane.b32.xlu0 %v2176, 64
      %v2230 = vpop.permute.xlu0 %2229
      %2233 = vrot.lane.b32.xlu0 %v2186, 80
      %v2234 = vpop.permute.xlu0 %2233
      %2237 = vrot.lane.b32.xlu0 %v2183, 96
      %v2238 = vpop.permute.xlu0 %2237
      %2241 = vrot.lane.b32.xlu0 %v2187, 112
      %v2242 = vpop.permute.xlu0 %2241
      %v2244 = vsel %vm375, %v2092, %v2190
      %v2245 = vsel %vm377, %v2244, %v2194
      %v2246 = vsel %vm379, %v2245, %v2198
      %v2247 = vsel %vm381, %v2246, %v2202
      %v2248 = vsel %vm383, %v2247, %v2206
      %v2249 = vsel %vm385, %v2248, %v2210
      %v2250 = vsel %vm387, %v2249, %v2214
      %v2251 = vsel %vm375, %v2160, %v2218
      %v2252 = vsel %vm377, %v2251, %v2222
      %v2253 = vsel %vm379, %v2252, %v2226
      %v2254 = vsel %vm381, %v2253, %v2230
      %v2255 = vsel %vm383, %v2254, %v2234
      %v2256 = vsel %vm385, %v2255, %v2238
      %v2257 = vsel %vm387, %v2256, %v2242
      %v2260 = vrot.slane %v626, 4
      %v2261 = vrot.slane %v633, 4
      %v2266 = vrot.slane %v1095, 4
      %v2267 = vrot.slane %v1102, 4
      %v2272 = vrot.slane %v1555, 4
      %v2273 = vrot.slane %v1562, 4
      %v2278 = vrot.slane %v2020, 4
      %v2279 = vrot.slane %v2027, 4
      %vm2282 = vcmask 1043456
      %v2283 = vsel %vm2282, %v388, %v2260
      %v2284 = vsel %vm2282, %v395, %v2261
      %v2285 = vsel %vm2282, %v856, %v2266
      %v2286 = vsel %vm2282, %v863, %v2267
      %v2287 = vsel %vm2282, %v1325, %v2272
      %v2288 = vsel %vm2282, %v1332, %v2273
      %v2289 = vsel %vm2282, %v1790, %v2278
      %v2290 = vsel %vm2282, %v1797, %v2279
      %v2291 = vld [vmem:[%s1] sm:$0xff]
      %v2292 = vld [vmem:[%s1 + $0x8] sm:$0xff]
      %v2293 = vld [vmem:[%s2] sm:$0xff]
      %v2294 = vld [vmem:[%s2 + $0x8] sm:$0xff]
      %2296 = vset.pattern.permute.xlu0 0
      %2297 = vperm.xlu0 %2296, %v2293
      %v2298 = vpop.permute.xlu0 %2297
      %2301 = vset.pattern.permute.xlu0 0
      %2302 = vperm.xlu0 %2301, %v2294
      %v2303 = vpop.permute.xlu0 %2302
      %vm2305 = vcmask 293888
      %v2307 = vsel %vm2305, %v2291, 0
      %v2310 = vsel %vm2305, %v2292, 0
      %v2313 = vsel %vm2282, %v2250, 0
      %v2316 = vsel %vm2282, %v2257, 0
      %2318 = vmatprep.subr.mxu0 %v2284
      %2319 = vmatpush1.msra.mxu0 %v2283
      %2320 = vmatprep.subr.mxu0 %v2286
      %2321 = vmatpush1.msra.mxu0 %v2285
      %2322 = vmatprep.subr.mxu0 %v2288
      %2323 = vmatpush1.msra.mxu0 %v2287
      %2324 = vmatprep.subr.mxu0 %v2290
      %2325 = vmatpush1.msra.mxu0 %v2289
      %2326 = vmatprep.subr.mxu0 %v2316
      %2327 = vmatpush1.msra.mxu0 %v2313
      %2328 = vmatprep.subr.mxu0 0.0
      %2329 = vmatpush1.msra.mxu0 0.0
      %2330 = vmatprep.subr.mxu0 0.0
      %2331 = vmatpush1.msra.mxu0 0.0
      %2332 = vmatprep.subr.mxu0 0.0
      %2333 = vmatpush1.msra.mxu0 0.0
      %2334 = vmatprep.subr.mxu0 0.0
      %2335 = vmatpush1.msra.mxu0 0.0
      %2336 = vmatprep.subr.mxu0 0.0
      %2337 = vmatpush1.msra.mxu0 0.0
      %2338 = vmatprep.subr.mxu0 0.0
      %2339 = vmatpush1.msra.mxu0 0.0
      %2340 = vmatprep.subr.mxu0 0.0
      %2341 = vmatpush1.msra.mxu0 0.0
      %2342 = vmatprep.subr.mxu0 0.0
      %2343 = vmatpush1.msra.mxu0 0.0
      %2344 = vmatprep.subr.mxu0 0.0
      %2345 = vmatpush1.msra.mxu0 0.0
      %2346 = vmatprep.subr.mxu0 0.0
      %2347 = vmatpush1.msra.mxu0 0.0
      %2348 = vmatprep.subr.mxu0 0.0
      %2349 = vmatpush1.msra.mxu0 0.0
      %2350 = vmatprep.subr.mxu0 0.0
      %2351 = vmatpush1.msra.mxu0 0.0
      %2352 = vmatprep.subr.mxu0 0.0
      %2353 = vmatpush1.msra.mxu0 0.0
      %2354 = vmatprep.subr.mxu0 0.0
      %2355 = vmatpush1.msra.mxu0 0.0
      %2356 = vmatprep.subr.mxu0 0.0
      %2357 = vmatpush1.msra.mxu0 0.0
      %2358 = vmatprep.subr.mxu0 0.0
      %2359 = vmatpush1.msra.mxu0 0.0
      %2360 = vmatprep.subr.mxu0 0.0
      %2361 = vmatpush1.msra.mxu0 0.0
      %2362 = vmatprep.subr.mxu0 0.0
      %2363 = vmatpush1.msra.mxu0 0.0
      %2364 = vmatprep.subr.mxu0 0.0
      %2365 = vmatpush1.msra.mxu0 0.0
      %2366 = vmatprep.subr.mxu0 0.0
      %2367 = vmatpush1.msra.mxu0 0.0
      %2368 = vmatprep.subr.mxu0 0.0
      %2369 = vmatpush1.msra.mxu0 0.0
      %2370 = vmatprep.subr.mxu0 0.0
      %2371 = vmatpush1.msra.mxu0 0.0
      %2372 = vmatprep.subr.mxu0 0.0
      %2373 = vmatpush1.msra.mxu0 0.0
      %2374 = vmatprep.subr.mxu0 0.0
      %2375 = vmatpush1.msra.mxu0 0.0
      %2376 = vmatprep.subr.mxu0 0.0
      %2377 = vmatpush1.msra.mxu0 0.0
      %2378 = vmatprep.subr.mxu0 0.0
      %2379 = vmatpush1.msra.mxu0 0.0
      %2380 = vmatprep.subr.mxu0 0.0
      %2381 = vmatpush1.msra.mxu0 0.0
      %2382 = vmatprep.mubr.f32.mxu0 0.0
      %2383 = vmatmul.mubr.f32.gmra.mrb[0].mxu0 %v2307
      %v2384 = vpop.f32.mrb[0].mxu0
      %v2385 = vadd.f32 %v2298, %v2384
      %v2386 = vpop.f32.mrb[0].mxu0
      %v2387 = vadd.f32 %v2298, %v2386
      %2388 = vmatprep.mubr.f32.mxu0 0.0
      %2389 = vmatmul.mubr.f32.gmra.mrb[0].mxu0 %v2310
      %v2390 = vpop.f32.mrb[0].mxu0
      %v2391 = vadd.f32 %v2303, %v2390
      %v2392 = vpop.f32.mrb[0].mxu0
      %v2393 = vadd.f32 %v2303, %v2392
      %2394 = vdwg.mxu0
      %2395 = vst [vmem:[%s170] sm:$0xff] %v2385
      %2396 = vst [vmem:[%s170 + $0x8] sm:$0xff] %v2387
      %2397 = vst [vmem:[%s170 + $0x10] sm:$0xff] %v2391
      %2398 = vst [vmem:[%s170 + $0x18] sm:$0xff] %v2393
      %p2399 = scmp.lt.s32.totalorder %s14, 1
      %s2400 = scalar_select %p2399, %s14, 1
      %s2401 = smul.addr %s2400, 4
      %s2402 = smul.addr %s2401, 8
      %s2403 = scalar_lea.vmem %s3, %s2402
      // Predicated region
      $region33: #{upsample_conv_layer.1} parent=31 // pred_check
        %p2404 = pneg %p100
      $region34: #{upsample_conv_layer.1} parent=31 // pred_check_branch
        %2406 = sbr.rel (%p2404) target = $region36
      $region35: #{upsample_conv_layer.1} parent=31 // pred_region
        _
      $region36: #{upsample_conv_layer.1} parent=31 // pred_fallthru
        _
    $region32: #{upsample_conv_layer.1} parent=5 // pred_fallthru
      _
    %p2407 = scmp.le.s32.totalorder 2, %s9
    // Predicated region
    $region37: #{upsample_conv_layer.1} parent=5 // pred_check
      %p2408 = pneg %p2407
    $region38: #{upsample_conv_layer.1} parent=5 // pred_check_branch
      %2410 = sbr.rel (%p2408) target = $region40
    $region39: #{upsample_conv_layer.1} parent=5 // pred_region
      %s2411 = ssub.s32 %s9, 2
      // Predicated region
      $region41: #{upsample_conv_layer.1} parent=39 // pred_check
        %p2412 = pneg %p106
      $region42: #{upsample_conv_layer.1} parent=39 // pred_check_branch
        %2414 = sbr.rel (%p2412) target = $region44
      $region43: #{upsample_conv_layer.1} parent=39 // pred_region
        %p2415 = scmp.lt.s32.totalorder %s15, 1
        %s2416 = scalar_select %p2415, %s15, 1
        %s2417 = smul.addr %s2416, 4
        %s2418 = smul.addr %s2417, 8
        %s2419 = scalar_lea.vmem %s3, %s2418
      $region44: #{upsample_conv_layer.1} parent=39 // pred_fallthru
        _
    $region40: #{upsample_conv_layer.1} parent=5 // pred_fallthru
      _
  $region6: #{upsample_conv_layer.1} parent=0 // loop_footer
    %s13 = sadd.s32 1, %s9
  $region7: #{upsample_conv_layer.1} parent=0 // loop_footer_branch
    %8 = sbr.rel target = $region3
  $region8: #{upsample_conv_layer.1} parent=0 // loop_exit
    _

</llo_original>
